<compile_context>
chip_gen: v6e
topology: v6e:2x2x1
jax: 0.10.0
libtpu: 0.0.40
codegen_flags: <defaults>
</compile_context>

<pallas_src>
import jax
import jax.numpy as jnp
from jax.experimental import pallas as pl
from jax.experimental.pallas import tpu as pltpu


# ----------------------------------------------------------------------------
# Pallas kernel: pool Bt boxes of one (image, channel-tile) per grid step.
# ----------------------------------------------------------------------------
def _roi_pool_kernel(feat_ref, wy_ref, wxt_ref, out_ref, u_ref):
    # feat_ref: (1, Ct, H, W)       feature channel-tile (native NCHW slice)
    # wy_ref:   (1, Bt, RH, H)      per-box height interpolation weights (f32)
    # wxt_ref:  (1, W, Bt*RW)       stacked+transposed width weights (feat dtype)
    # out_ref:  (1, RH, Ct, Bt*RW)  pooled output (lane-dense last dim)
    # u_ref:    (Ct, H, Bt*RW) f32  VMEM scratch: width-contracted features
    feat = feat_ref[0]                       # (Ct, H, W)
    wxt = wxt_ref[0]                         # (W, Bt*RW)
    bt = wy_ref.shape[1]
    rw = wxt_ref.shape[2] // bt

    # 1) Width contraction: one fat MXU matmul (M=Ct*H, K=W, N=Bt*RW),
    #    f32 accumulation.  No relayout: lhs contracts its last dim, rhs is
    #    already (K, N).
    u_ref[...] = jnp.einsum(
        "chw,wx->chx", feat, wxt, preferred_element_type=jnp.float32
    )

    # 2) Height contraction per box (small: K=H, output RH*Ct*RW).  Static
    #    unroll over the Bt boxes of this tile.  The natural dot_general
    #    output order (RH, Ct, RW) is stored directly -> no transpose, and
    #    the store target's block keeps a dense Bt*RW lane dimension.
    for b in range(bt):
        wy_b = wy_ref[0, b]                              # (RH, H)
        u_b = u_ref[:, :, b * rw:(b + 1) * rw]           # (Ct, H, RW)
        o_b = jnp.einsum(
            "ph,chq->pcq", wy_b, u_b, preferred_element_type=jnp.float32
        )                                                # (RH, Ct, RW)
        out_ref[0, :, :, b * rw:(b + 1) * rw] = o_b.astype(out_ref.dtype)


# ----------------------------------------------------------------------------
# Glue: per-box separable bilinear interpolation weights (plain JAX / XLA).
# ----------------------------------------------------------------------------
def _interp_weights(start, bin_size, out_size, in_size):
    """Weights (B, out_size, in_size) for one sample at each bin center."""
    # TODO(synk): torchvision RoIAlign zeroes out-of-map samples and uses an
    # adaptive sampling_ratio; here samples are clipped and sampling_ratio=1.
    idx = jnp.arange(out_size, dtype=jnp.float32)
    pts = start[:, None] - 0.5 + (idx[None, :] + 0.5) * bin_size[:, None]
    pts = jnp.clip(pts, 0.0, float(in_size - 1))
    lo_f = jnp.floor(pts)
    frac = pts - lo_f
    lo = lo_f.astype(jnp.int32)
    hi = jnp.minimum(lo + 1, in_size - 1)
    cols = jnp.arange(in_size, dtype=jnp.int32)
    w_lo = (cols[None, None, :] == lo[..., None]).astype(jnp.float32) * (
        1.0 - frac[..., None]
    )
    w_hi = (cols[None, None, :] == hi[..., None]).astype(jnp.float32) * frac[
        ..., None
    ]
    return w_lo + w_hi  # (B, out_size, in_size)


def _pick_channel_block(c, h, w, itemsize, budget_bytes):
    """Largest channel tile (divisor of C, multiple of 128 when tiled) whose
    feature block roughly fits the per-buffer VMEM budget."""
    ct = c
    while (
        ct * h * w * itemsize > budget_bytes
        and ct % 2 == 0
        and (ct // 2) % 128 == 0
    ):
        ct //= 2
    return ct


# ----------------------------------------------------------------------------
# Wrapper mirroring RoIPooler.forward(features, boxes) -> pooled features.
# ----------------------------------------------------------------------------
class RoIPooler:
    """RoI pooler (single-level RoIAlign) backed by a Pallas TPU kernel."""

    def __init__(self, resolution, box_block=None,
                 feat_block_bytes=6 * 1024 * 1024):
        self.resolution = tuple(resolution)
        self.box_block = box_block                  # boxes per grid step
        self.feat_block_bytes = feat_block_bytes    # per-buffer VMEM budget

    def __call__(self, features, boxes):
        # TODO(synk): multi-level (FPN) box-to-level assignment; we pool from
        # the first provided feature level only.
        feat = features[0]                          # (N, C, H, W), any dtype
        n, c, h, w = feat.shape
        rh, rw = self.resolution
        dtype = feat.dtype

        counts = [int(b.shape[0]) for b in boxes]
        if sum(counts) == 0:
            return jnp.zeros((0, c, rh, rw), dtype)
        mmax = max(counts)

        # Box tile size: aim for Bt*RW ~ 128 lanes (MXU N / lane density).
        bt = self.box_block or max(1, 128 // rw)
        bt = min(bt, mmax)
        n_bt = -(-mmax // bt)
        mpad = n_bt * bt

        # Channel tiling keeps the double-buffered feature block VMEM-friendly
        # (v7x has only 64 MiB of VMEM).
        ct = _pick_channel_block(c, h, w, jnp.dtype(dtype).itemsize,
                                 self.feat_block_bytes)
        n_ct = c // ct

        # ---- per-image padded boxes -> separable interpolation weights -----
        pb = jnp.zeros((n, mpad, 4), jnp.float32)
        for i, b in enumerate(boxes):
            if counts[i]:
                pb = pb.at[i, : counts[i]].set(b.astype(jnp.float32))
        pbf = pb.reshape(n * mpad, 4)
        x1, y1, x2, y2 = pbf[:, 0], pbf[:, 1], pbf[:, 2], pbf[:, 3]
        wy = _interp_weights(y1, (y2 - y1) / rh, rh, h)   # (n*mpad, RH, H) f32
        wx = _interp_weights(x1, (x2 - x1) / rw, rw, w)   # (n*mpad, RW, W) f32

        # ---- kernel-side layouts (wrapper-side layout plumbing only) --------
        wy_in = wy.reshape(n * n_bt, bt, rh, h)                      # f32
        wxt_in = (
            wx.reshape(n * n_bt, bt * rw, w).transpose(0, 2, 1).astype(dtype)
        )                                                            # (., W, Bt*RW)
        feat_in = feat.reshape(n * n_ct, ct, h, w)                   # pure reshape

        grid = (n, n_ct, n_bt)
        out = pl.pallas_call(
            _roi_pool_kernel,
            out_shape=jax.ShapeDtypeStruct(
                (n * n_ct * n_bt, rh, ct, bt * rw), dtype
            ),
            grid_spec=pltpu.PrefetchScalarGridSpec(
                num_scalar_prefetch=0,
                grid=grid,
                in_specs=[
                    # Feature tile: block index depends only on (image, ctile),
                    # so the copy is elided across the inner box-tile axis.
                    pl.BlockSpec(
                        (1, ct, h, w),
                        lambda i, cc, t: (i * n_ct + cc, 0, 0, 0),
                    ),
                    pl.BlockSpec(
                        (1, bt, rh, h),
                        lambda i, cc, t: (i * n_bt + t, 0, 0, 0),
                    ),
                    pl.BlockSpec(
                        (1, w, bt * rw),
                        lambda i, cc, t: (i * n_bt + t, 0, 0),
                    ),
                ],
                out_specs=pl.BlockSpec(
                    (1, rh, ct, bt * rw),
                    lambda i, cc, t: ((i * n_ct + cc) * n_bt + t, 0, 0, 0),
                ),
                scratch_shapes=[pltpu.VMEM((ct, h, bt * rw), jnp.float32)],
            ),
            compiler_params=pltpu.CompilerParams(
                dimension_semantics=("parallel", "parallel", "arbitrary"),
                vmem_limit_bytes=64 * 1024 * 1024,
            ),
        )(feat_in, wy_in, wxt_in)

        # ---- back to (sum(Ni), C, RH, RW) ----------------------------------
        out = out.reshape(n, n_ct, n_bt, rh, ct, bt, rw)
        out = out.transpose(0, 2, 5, 1, 4, 3, 6)   # (n, n_bt, bt, n_ct, ct, rh, rw)
        out = out.reshape(n, mpad, c, rh, rw)
        return jnp.concatenate([out[i, : counts[i]] for i in range(n)], axis=0)


if __name__ == "__main__":
    key = jax.random.PRNGKey(0)
    k_feat, k_b0, k_b1 = jax.random.split(key, 3)

    N, C, H, W = 2, 4, 16, 16
    resolution = (7, 7)

    features = [jax.random.normal(k_feat, (N, C, H, W), dtype=jnp.float32)]

    def _make_boxes(k, nb):
        xy = jax.random.uniform(k, (nb, 2), minval=0.0, maxval=8.0)
        wh = jax.random.uniform(
            jax.random.fold_in(k, 1), (nb, 2), minval=3.0, maxval=7.0
        )
        return jnp.concatenate([xy, xy + wh], axis=-1)  # xyxy

    boxes = [_make_boxes(k_b0, 3), _make_boxes(k_b1, 2)]

    pooler = RoIPooler(resolution)
    out = pooler(features, boxes)
    out = jax.block_until_ready(out)

    # pure-JAX reference (same interpolation-weight construction)
    all_boxes = jnp.concatenate(boxes, axis=0)
    batch_idx = jnp.concatenate(
        [jnp.full((b.shape[0],), i, jnp.int32) for i, b in enumerate(boxes)]
    )
    bx1, by1, bx2, by2 = (all_boxes[:, k] for k in range(4))
    ref_wy = _interp_weights(by1, (by2 - by1) / resolution[0], resolution[0], H)
    ref_wx = _interp_weights(bx1, (bx2 - bx1) / resolution[1], resolution[1], W)
    f = features[0][batch_idx]                          # (B, C, H, W)
    t = jnp.einsum("bchw,bqw->bchq", f, ref_wx)
    ref = jnp.einsum("bph,bchq->bcpq", ref_wy, t)

    assert out.shape == (5, C, resolution[0], resolution[1]), out.shape
    err = float(jnp.max(jnp.abs(out - ref)))
    assert jnp.allclose(out, ref, atol=1e-4, rtol=1e-4), err
    print("KERNEL_OK")
</pallas_src>

<mosaic_0001>
module attributes {stable_mosaic.version = 11 : i64} {
  func.func @_roi_pool_kernel(%arg0: i32, %arg1: i32, %arg2: i32, %arg3: memref<1x4x16x16xf32, #tpu.memory_space<vmem>>, %arg4: memref<1x3x7x16xf32, #tpu.memory_space<vmem>>, %arg5: memref<1x16x21xf32, #tpu.memory_space<vmem>>, %arg6: memref<1x7x4x21xf32, #tpu.memory_space<vmem>>, %arg7: memref<4x16x21xf32, #tpu.memory_space<vmem>>) attributes {dimension_semantics = [#tpu.dimension_semantics<parallel>, #tpu.dimension_semantics<parallel>, #tpu.dimension_semantics<arbitrary>], iteration_bounds = array<i64: 2, 1, 1>, scalar_prefetch = 0 : i64, scratch_operands = 1 : i64, tpu.core_type = #tpu.core_type<tc>, window_params = [{transform_indices = @transform_0, window_bounds = array<i64: 1, 4, 16, 16>}, {transform_indices = @transform_1, window_bounds = array<i64: 1, 3, 7, 16>}, {transform_indices = @transform_2, window_bounds = array<i64: 1, 16, 21>}, {transform_indices = @transform_3, window_bounds = array<i64: 1, 7, 4, 21>}]} {
    %c0 = arith.constant 0 : index
    %c0_0 = arith.constant 0 : index
    %c0_1 = arith.constant 0 : index
    %c0_2 = arith.constant 0 : index
    %0 = vector.load %arg3[%c0, %c0_0, %c0_1, %c0_2] : memref<1x4x16x16xf32, #tpu.memory_space<vmem>>, vector<1x4x16x16xf32>
    %1 = vector.shape_cast %0 : vector<1x4x16x16xf32> to vector<4x16x16xf32>
    %c0_3 = arith.constant 0 : index
    %c0_4 = arith.constant 0 : index
    %c0_5 = arith.constant 0 : index
    %2 = vector.load %arg5[%c0_3, %c0_4, %c0_5] : memref<1x16x21xf32, #tpu.memory_space<vmem>>, vector<1x16x21xf32>
    %3 = vector.shape_cast %2 : vector<1x16x21xf32> to vector<16x21xf32>
    "tpu.trace_start"() <{level = 10 : i32, message = "chw,wx->chx"}> : () -> ()
    %cst = arith.constant dense<0.000000e+00> : vector<4x16x21xf32>
    %4 = tpu.matmul %1, %3, %cst {dimension_numbers = #tpu.dot_dimension_numbers<[2], [0], [0, 1], [1], [0, 0, 0, 1, 1, 1], [], []>} : vector<4x16x16xf32>, vector<16x21xf32>, vector<4x16x21xf32> -> vector<4x16x21xf32>
    "tpu.trace_stop"() : () -> ()
    %c0_6 = arith.constant 0 : index
    %c0_7 = arith.constant 0 : index
    %c0_8 = arith.constant 0 : index
    %5 = vector.load %arg7[%c0_6, %c0_7, %c0_8] : memref<4x16x21xf32, #tpu.memory_space<vmem>>, vector<4x16x21xf32>
    tpu.vector_store %arg7[%c0_6, %c0_7, %c0_8], %4 {strides = array<i32>} : memref<4x16x21xf32, #tpu.memory_space<vmem>>, vector<4x16x21xf32>,
    %c0_9 = arith.constant 0 : index
    %c0_10 = arith.constant 0 : index
    %c0_11 = arith.constant 0 : index
    %c0_12 = arith.constant 0 : index
    %6 = vector.load %arg4[%c0_9, %c0_10, %c0_11, %c0_12] : memref<1x3x7x16xf32, #tpu.memory_space<vmem>>, vector<1x1x7x16xf32>
    %7 = vector.shape_cast %6 : vector<1x1x7x16xf32> to vector<7x16xf32>
    %c0_13 = arith.constant 0 : index
    %c0_14 = arith.constant 0 : index
    %c0_15 = arith.constant 0 : index
    %8 = vector.load %arg7[%c0_13, %c0_14, %c0_15] : memref<4x16x21xf32, #tpu.memory_space<vmem>>, vector<4x16x7xf32>
    "tpu.trace_start"() <{level = 10 : i32, message = "ph,chq->pcq"}> : () -> ()
    %cst_16 = arith.constant dense<0.000000e+00> : vector<7x4x7xf32>
    %9 = tpu.matmul %7, %8, %cst_16 {dimension_numbers = #tpu.dot_dimension_numbers<[1], [1], [0], [0, 2], [0, 0, 1, 0, 1, 2], [], []>} : vector<7x16xf32>, vector<4x16x7xf32>, vector<7x4x7xf32> -> vector<7x4x7xf32>
    "tpu.trace_stop"() : () -> ()
    %c0_17 = arith.constant 0 : index
    %c0_18 = arith.constant 0 : index
    %c0_19 = arith.constant 0 : index
    %c0_20 = arith.constant 0 : index
    %10 = vector.load %arg6[%c0_17, %c0_18, %c0_19, %c0_20] : memref<1x7x4x21xf32, #tpu.memory_space<vmem>>, vector<1x7x4x7xf32>
    %11 = vector.shape_cast %10 : vector<1x7x4x7xf32> to vector<7x4x7xf32>
    %12 = vector.shape_cast %9 : vector<7x4x7xf32> to vector<1x7x4x7xf32>
    tpu.vector_store %arg6[%c0_17, %c0_18, %c0_19, %c0_20], %12 {strides = array<i32>} : memref<1x7x4x21xf32, #tpu.memory_space<vmem>>, vector<1x7x4x7xf32>,
    %c0_21 = arith.constant 0 : index
    %c1 = arith.constant 1 : index
    %c0_22 = arith.constant 0 : index
    %c0_23 = arith.constant 0 : index
    %13 = vector.load %arg4[%c0_21, %c1, %c0_22, %c0_23] : memref<1x3x7x16xf32, #tpu.memory_space<vmem>>, vector<1x1x7x16xf32>
    %14 = vector.shape_cast %13 : vector<1x1x7x16xf32> to vector<7x16xf32>
    %c0_24 = arith.constant 0 : index
    %c0_25 = arith.constant 0 : index
    %c7 = arith.constant 7 : index
    %15 = vector.load %arg7[%c0_24, %c0_25, %c7] : memref<4x16x21xf32, #tpu.memory_space<vmem>>, vector<4x16x7xf32>
    "tpu.trace_start"() <{level = 10 : i32, message = "ph,chq->pcq"}> : () -> ()
    %cst_26 = arith.constant dense<0.000000e+00> : vector<7x4x7xf32>
    %16 = tpu.matmul %14, %15, %cst_26 {dimension_numbers = #tpu.dot_dimension_numbers<[1], [1], [0], [0, 2], [0, 0, 1, 0, 1, 2], [], []>} : vector<7x16xf32>, vector<4x16x7xf32>, vector<7x4x7xf32> -> vector<7x4x7xf32>
    "tpu.trace_stop"() : () -> ()
    %c0_27 = arith.constant 0 : index
    %c0_28 = arith.constant 0 : index
    %c0_29 = arith.constant 0 : index
    %c7_30 = arith.constant 7 : index
    %17 = vector.load %arg6[%c0_27, %c0_28, %c0_29, %c7_30] : memref<1x7x4x21xf32, #tpu.memory_space<vmem>>, vector<1x7x4x7xf32>
    %18 = vector.shape_cast %17 : vector<1x7x4x7xf32> to vector<7x4x7xf32>
    %19 = vector.shape_cast %16 : vector<7x4x7xf32> to vector<1x7x4x7xf32>
    tpu.vector_store %arg6[%c0_27, %c0_28, %c0_29, %c7_30], %19 {strides = array<i32>} : memref<1x7x4x21xf32, #tpu.memory_space<vmem>>, vector<1x7x4x7xf32>,
    %c0_31 = arith.constant 0 : index
    %c2 = arith.constant 2 : index
    %c0_32 = arith.constant 0 : index
    %c0_33 = arith.constant 0 : index
    %20 = vector.load %arg4[%c0_31, %c2, %c0_32, %c0_33] : memref<1x3x7x16xf32, #tpu.memory_space<vmem>>, vector<1x1x7x16xf32>
    %21 = vector.shape_cast %20 : vector<1x1x7x16xf32> to vector<7x16xf32>
    %c0_34 = arith.constant 0 : index
    %c0_35 = arith.constant 0 : index
    %c14 = arith.constant 14 : index
    %22 = vector.load %arg7[%c0_34, %c0_35, %c14] : memref<4x16x21xf32, #tpu.memory_space<vmem>>, vector<4x16x7xf32>
    "tpu.trace_start"() <{level = 10 : i32, message = "ph,chq->pcq"}> : () -> ()
    %cst_36 = arith.constant dense<0.000000e+00> : vector<7x4x7xf32>
    %23 = tpu.matmul %21, %22, %cst_36 {dimension_numbers = #tpu.dot_dimension_numbers<[1], [1], [0], [0, 2], [0, 0, 1, 0, 1, 2], [], []>} : vector<7x16xf32>, vector<4x16x7xf32>, vector<7x4x7xf32> -> vector<7x4x7xf32>
    "tpu.trace_stop"() : () -> ()
    %c0_37 = arith.constant 0 : index
    %c0_38 = arith.constant 0 : index
    %c0_39 = arith.constant 0 : index
    %c14_40 = arith.constant 14 : index
    %24 = vector.load %arg6[%c0_37, %c0_38, %c0_39, %c14_40] : memref<1x7x4x21xf32, #tpu.memory_space<vmem>>, vector<1x7x4x7xf32>
    %25 = vector.shape_cast %24 : vector<1x7x4x7xf32> to vector<7x4x7xf32>
    %26 = vector.shape_cast %23 : vector<7x4x7xf32> to vector<1x7x4x7xf32>
    tpu.vector_store %arg6[%c0_37, %c0_38, %c0_39, %c14_40], %26 {strides = array<i32>} : memref<1x7x4x21xf32, #tpu.memory_space<vmem>>, vector<1x7x4x7xf32>,
    return
  }
  func.func @transform_0(%arg0: i32, %arg1: i32, %arg2: i32) -> (i32, i32, i32, i32) {
    %c1_i32 = arith.constant 1 : i32
    %0 = arith.muli %arg0, %c1_i32 : i32
    %1 = arith.addi %0, %arg1 : i32
    %c0_i32 = arith.constant 0 : i32
    %c0_i32_0 = arith.constant 0 : i32
    %c0_i32_1 = arith.constant 0 : i32
    %c0_i32_2 = arith.constant 0 : i32
    return %1, %c0_i32, %c0_i32_0, %c0_i32_1 : i32, i32, i32, i32
  }
  func.func @transform_1(%arg0: i32, %arg1: i32, %arg2: i32) -> (i32, i32, i32, i32) {
    %c1_i32 = arith.constant 1 : i32
    %0 = arith.muli %arg0, %c1_i32 : i32
    %1 = arith.addi %0, %arg2 : i32
    %c0_i32 = arith.constant 0 : i32
    %c0_i32_0 = arith.constant 0 : i32
    %c0_i32_1 = arith.constant 0 : i32
    %c0_i32_2 = arith.constant 0 : i32
    return %1, %c0_i32, %c0_i32_0, %c0_i32_1 : i32, i32, i32, i32
  }
  func.func @transform_2(%arg0: i32, %arg1: i32, %arg2: i32) -> (i32, i32, i32) {
    %c1_i32 = arith.constant 1 : i32
    %0 = arith.muli %arg0, %c1_i32 : i32
    %1 = arith.addi %0, %arg2 : i32
    %c0_i32 = arith.constant 0 : i32
    %c0_i32_0 = arith.constant 0 : i32
    %c0_i32_1 = arith.constant 0 : i32
    return %1, %c0_i32, %c0_i32_0 : i32, i32, i32
  }
  func.func @transform_3(%arg0: i32, %arg1: i32, %arg2: i32) -> (i32, i32, i32, i32) {
    %c1_i32 = arith.constant 1 : i32
    %0 = arith.muli %arg0, %c1_i32 : i32
    %1 = arith.addi %0, %arg1 : i32
    %c1_i32_0 = arith.constant 1 : i32
    %2 = arith.muli %1, %c1_i32_0 : i32
    %3 = arith.addi %2, %arg2 : i32
    %c0_i32 = arith.constant 0 : i32
    %c0_i32_1 = arith.constant 0 : i32
    %c0_i32_2 = arith.constant 0 : i32
    %c0_i32_3 = arith.constant 0 : i32
    return %3, %c0_i32, %c0_i32_1, %c0_i32_2 : i32, i32, i32, i32
  }
}

</mosaic_0001>

<llo_original>
// kernel: tpu_custom_call.1
$region0: #{tpu_custom_call.1}
  #allocation0 [shape = 'u32[]', space=smem, size = 0x4, offset = 0x4, fixed_abs, tag = 'smem constant byte address 0x4 - core index']
  #allocation1 [shape = 'u32[144,128]{1,0:T(1,128)}', space=vmem, size = 0x12000, scoped, tag = 'internal scratch']
  #allocation2 [shape = 'f32[4,16,21]{2,1,0:T(8,128)}', space=vmem, size = 0x8000, scoped, tag = 'scratch operand']
  %s0 = inlined_call_operand.hbm [shape: f32[2,4,16,16], index: 0, kind: input, shape index: {}]
  %s1 = inlined_call_operand.vmem [shape: f32[2,3,7,16], index: 1, kind: input, shape index: {}]
  %s2 = inlined_call_operand.vmem [shape: f32[2,16,21], index: 2, kind: input, shape index: {}]
  %s3 = inlined_call_operand.hbm [shape: f32[2,7,4,21], index: 3, kind: output, shape index: {}]
  %s4 = sld [smem:[#allocation0]]
  $region49: #{tpu_custom_call.1} parent=0
    _
  %s6 = ssub.s32 1, %s4
  %s7 = scalar_select 0, %s6, %s4
  $region1: #{tpu_custom_call.1} parent=0
    #allocation3 [shape = 'u8[65536]{0}', space=vmem, size = 0x10000, scoped, tag = 'input window, operand 0']
    #allocation4 [shape = 's32[2]{0}', space=sflag, size = 0x8, scoped, tag = 'scoped memory for tpu_custom_call.1']
    #allocation5 [shape = 's32[2]{0}', space=sflag, size = 0x8, scoped, tag = 'scoped memory for tpu_custom_call.1']
    #allocation6 [shape = 'u8[28672]{0}', space=vmem, size = 0x7000, scoped, tag = 'output window, operand 0']
    %8 = vsyncpa [#allocation4], 0
    %s9 = scalar_lea.sflag [#allocation4], 1
    %10 = vsyncpa %s9, 0
    %11 = vsyncpa [#allocation5], 0
    %s12 = scalar_lea.sflag [#allocation5], 1
    %13 = vsyncpa %s12, 0
    loop: start=0, step=1, limit=4
    $region2: #{tpu_custom_call.1} parent=1 // loop_pre_header
      _
    $region3: #{tpu_custom_call.1} parent=1 // loop_header
      %s15 = sphi 0, %s19
      %p16 = scmp.ge.s32.totalorder %s15, 4
      %s22 = sphi 0, %s41
      %s23 = sphi 0, %s37
      %s24 = sphi 0, %s33
      %s25 = sphi 0, %s22
      %s26 = sphi 0, %s23
      %s27 = sphi 0, %s24
      %s28 = sphi 0, %s25
      %s29 = sphi 0, %s26
      %s30 = sphi 0, %s27
      %s46 = sphi 0, %s48
      %s49 = sphi 0, %s46
      %s50 = sphi 0, %s49
      %s66 = sphi 0, %s50
      %s74 = sphi 0, %s76
      %s77 = sphi 0, %s74
      %s78 = sphi 0, %s77
      %s94 = sphi 0, %s78
      %s102 = sphi 0, %s104
      %s105 = sphi 0, %s102
      %s106 = sphi 0, %s105
      %s122 = sphi 0, %s106
      %s132 = sphi 0, %s134
      %s135 = sphi 0, %s132
      %s136 = sphi 0, %s135
      %s152 = sphi 0, %s136
    $region4: #{tpu_custom_call.1} parent=1 // loop_header_branch
      %18 = sbr.rel (%p16) target = $region8
    $region5: #{tpu_custom_call.1} parent=1 // loop_body
      %s20 = ssub.s32 %s15, 1
      %s21 = ssub.s32 %s15, 2
      %s31 = sadd.s32 1, %s24
      %p32 = scmp.ge.s32.totalorder %s31, 1
      %s33 = scalar_select %p32, 0, %s31
      %s34 = sadd.s32 1, %s23
      %s35 = scalar_select %p32, %s34, %s23
      %p36 = scmp.ge.s32.totalorder %s35, 1
      %s37 = scalar_select %p36, 0, %s35
      %s38 = sadd.s32 1, %s22
      %s39 = scalar_select %p36, %s38, %s22
      %p40 = scmp.ge.s32.totalorder %s39, 2
      %s41 = scalar_select %p40, 0, %s39
      %s42 = sadd.s32 %s22, %s23
      %s43 = sadd.s32 %s41, %s37
      %s44 = ssub.s32 %s42, %s43
      %p45 = scmp.eq.s32.totalorder %s44, 0
      %s47 = sadd.s32 %s46, 1
      %s48 = scalar_select %p45, %s46, %s47
      %p51 = pneg %p45
      %p52 = scmp.eq.s32.totalorder %s15, 1
      %p53 = por %p51, %p52
      %p54 = scmp.ne.s32.totalorder %s46, %s49
      %p55 = scmp.eq.s32.totalorder %s15, 0
      %p56 = por %p54, %p55
      %p57 = scmp.ne.s32.totalorder %s46, %s49
      %p58 = scmp.eq.s32.totalorder %s20, 1
      %p59 = por %p57, %p58
      %p60 = scmp.ne.s32.totalorder %s49, %s50
      %p61 = scmp.eq.s32.totalorder %s20, 0
      %p62 = por %p60, %p61
      %p63 = scmp.ne.s32.totalorder %s49, %s50
      %p64 = scmp.eq.s32.totalorder %s21, 1
      %p65 = por %p63, %p64
      %p67 = scmp.ne.s32.totalorder %s50, %s66
      %p68 = scmp.eq.s32.totalorder %s21, 0
      %p69 = por %p67, %p68
      %s70 = sadd.s32 %s22, %s24
      %s71 = sadd.s32 %s41, %s33
      %s72 = ssub.s32 %s70, %s71
      %p73 = scmp.eq.s32.totalorder %s72, 0
      %s75 = sadd.s32 %s74, 1
      %s76 = scalar_select %p73, %s74, %s75
      %p79 = pneg %p73
      %p80 = scmp.eq.s32.totalorder %s15, 1
      %p81 = por %p79, %p80
      %p82 = scmp.ne.s32.totalorder %s74, %s77
      %p83 = scmp.eq.s32.totalorder %s15, 0
      %p84 = por %p82, %p83
      %p85 = scmp.ne.s32.totalorder %s74, %s77
      %p86 = scmp.eq.s32.totalorder %s20, 1
      %p87 = por %p85, %p86
      %p88 = scmp.ne.s32.totalorder %s77, %s78
      %p89 = scmp.eq.s32.totalorder %s20, 0
      %p90 = por %p88, %p89
      %p91 = scmp.ne.s32.totalorder %s77, %s78
      %p92 = scmp.eq.s32.totalorder %s21, 1
      %p93 = por %p91, %p92
      %p95 = scmp.ne.s32.totalorder %s78, %s94
      %p96 = scmp.eq.s32.totalorder %s21, 0
      %p97 = por %p95, %p96
      %s98 = sadd.s32 %s22, %s24
      %s99 = sadd.s32 %s41, %s33
      %s100 = ssub.s32 %s98, %s99
      %p101 = scmp.eq.s32.totalorder %s100, 0
      %s103 = sadd.s32 %s102, 1
      %s104 = scalar_select %p101, %s102, %s103
      %p107 = pneg %p101
      %p108 = scmp.eq.s32.totalorder %s15, 1
      %p109 = por %p107, %p108
      %p110 = scmp.ne.s32.totalorder %s102, %s105
      %p111 = scmp.eq.s32.totalorder %s15, 0
      %p112 = por %p110, %p111
      %p113 = scmp.ne.s32.totalorder %s102, %s105
      %p114 = scmp.eq.s32.totalorder %s20, 1
      %p115 = por %p113, %p114
      %p116 = scmp.ne.s32.totalorder %s105, %s106
      %p117 = scmp.eq.s32.totalorder %s20, 0
      %p118 = por %p116, %p117
      %p119 = scmp.ne.s32.totalorder %s105, %s106
      %p120 = scmp.eq.s32.totalorder %s21, 1
      %p121 = por %p119, %p120
      %p123 = scmp.ne.s32.totalorder %s106, %s122
      %p124 = scmp.eq.s32.totalorder %s21, 0
      %p125 = por %p123, %p124
      %s126 = sadd.s32 %s22, %s23
      %s127 = sadd.s32 %s126, %s24
      %s128 = sadd.s32 %s41, %s37
      %s129 = sadd.s32 %s128, %s33
      %s130 = ssub.s32 %s127, %s129
      %p131 = scmp.eq.s32.totalorder %s130, 0
      %s133 = sadd.s32 %s132, 1
      %s134 = scalar_select %p131, %s132, %s133
      %p137 = pneg %p131
      %p138 = scmp.eq.s32.totalorder %s15, 1
      %p139 = por %p137, %p138
      %p140 = scmp.ne.s32.totalorder %s132, %s135
      %p141 = scmp.eq.s32.totalorder %s15, 0
      %p142 = por %p140, %p141
      %p143 = scmp.ne.s32.totalorder %s132, %s135
      %p144 = scmp.eq.s32.totalorder %s20, 1
      %p145 = por %p143, %p144
      %p146 = scmp.ne.s32.totalorder %s135, %s136
      %p147 = scmp.eq.s32.totalorder %s20, 0
      %p148 = por %p146, %p147
      %p149 = scmp.ne.s32.totalorder %s135, %s136
      %p150 = scmp.eq.s32.totalorder %s21, 1
      %p151 = por %p149, %p150
      %p153 = scmp.ne.s32.totalorder %s136, %s152
      %p154 = scmp.eq.s32.totalorder %s21, 0
      %p155 = por %p153, %p154
      %p156 = scmp.le.s32.totalorder 1, %s15
      %p157 = scmp.lt.s32.totalorder %s15, 3
      %p158 = pnand %p156, %p157
      %p159 = pneg %p158
      // Predicated region
      $region9: #{tpu_custom_call.1} parent=5 // pred_check
        _
      $region10: #{tpu_custom_call.1} parent=5 // pred_check_branch
        %161 = sbr.rel (%p158) target = $region12
      $region11: #{tpu_custom_call.1} parent=5 // pred_region
        %s162 = ssub.s32 %s15, 1
      $region12: #{tpu_custom_call.1} parent=5 // pred_fallthru
        _
      %p163 = scmp.lt.s32.totalorder %s15, 2
      // Predicated region
      $region13: #{tpu_custom_call.1} parent=5 // pred_check
        %p164 = pneg %p163
      $region14: #{tpu_custom_call.1} parent=5 // pred_check_branch
        %166 = sbr.rel (%p164) target = $region16
      $region15: #{tpu_custom_call.1} parent=5 // pred_region
        // Predicated region
        $region17: #{tpu_custom_call.1} parent=15 // pred_check
          %p167 = pneg %p56
        $region18: #{tpu_custom_call.1} parent=15 // pred_check_branch
          %169 = sbr.rel (%p167) target = $region20
        $region19: #{tpu_custom_call.1} parent=15 // pred_region
          %s170 = sand.u32 %s46, 1
          %s171 = scalar_lea.sflag [#allocation4], %s170
          %s172 = sand.u32 %s46, 1
          %s173 = smul.addr %s172, 64
          %s174 = scalar_lea.vmem [#allocation3], %s173
          %s175 = sadd.s32 %s22, %s23
          %s177 = ssub.s32 1024, 1024
          %178 = vsyncadd %s171, %s177
          %s179 = smul.addr %s175, 8
          %s180 = smul.addr %s179, 128
          %s181 = scalar_lea.hbm %s0, %s180
          %s182 = sshll.u32 %s174, 4
          %s183 = int_to_ptr.vmem [resolvable:$true] %s182
          %188 = dma.hbm_to_vmem [thread:$0]  %s181, 1024, %s183, %s171, 128, 128, 8
        $region20: #{tpu_custom_call.1} parent=15 // pred_fallthru
          _
        // Predicated region
        $region21: #{tpu_custom_call.1} parent=15 // pred_check
          %p189 = pneg %p84
        $region22: #{tpu_custom_call.1} parent=15 // pred_check_branch
          %191 = sbr.rel (%p189) target = $region24
        $region23: #{tpu_custom_call.1} parent=15 // pred_region
          %s192 = sadd.s32 %s22, %s24
          %p193 = scmp.lt.s32.totalorder %s192, 1
          %s194 = scalar_select %p193, %s192, 1
          %s195 = smul.addr %s194, 3
          %s196 = smul.addr %s195, 8
          %s197 = scalar_lea.vmem %s1, %s196
          %s198 = sadd.s32 %s22, %s24
        $region24: #{tpu_custom_call.1} parent=15 // pred_fallthru
          _
        // Predicated region
        $region25: #{tpu_custom_call.1} parent=15 // pred_check
          %p199 = pneg %p112
        $region26: #{tpu_custom_call.1} parent=15 // pred_check_branch
          %201 = sbr.rel (%p199) target = $region28
        $region27: #{tpu_custom_call.1} parent=15 // pred_region
          %s202 = sadd.s32 %s22, %s24
          %p203 = scmp.lt.s32.totalorder %s202, 1
          %s204 = scalar_select %p203, %s202, 1
          %s205 = smul.addr %s204, 2
          %s206 = smul.addr %s205, 8
          %s207 = scalar_lea.vmem %s2, %s206
          %s208 = sadd.s32 %s22, %s24
        $region28: #{tpu_custom_call.1} parent=15 // pred_fallthru
          _
      $region16: #{tpu_custom_call.1} parent=5 // pred_fallthru
        _
      %p209 = scmp.le.s32.totalorder 1, %s15
      %p210 = scmp.lt.s32.totalorder %s15, 3
      %p211 = pnand %p209, %p210
      %p212 = pneg %p211
      // Predicated region
      $region29: #{tpu_custom_call.1} parent=5 // pred_check
        _
      $region30: #{tpu_custom_call.1} parent=5 // pred_check_branch
        %214 = sbr.rel (%p211) target = $region32
      $region31: #{tpu_custom_call.1} parent=5 // pred_region
        %s215 = ssub.s32 %s15, 1
        %s216 = sand.u32 %s49, 1
        %s217 = scalar_lea.sflag [#allocation4], %s216
        %s218 = sand.u32 %s49, 1
        %s219 = smul.addr %s218, 64
        %s220 = scalar_lea.vmem [#allocation3], %s219
        // Predicated region
        $region33: #{tpu_custom_call.1} parent=31 // pred_check
          %p221 = pneg %p62
        $region34: #{tpu_custom_call.1} parent=31 // pred_check_branch
          %223 = sbr.rel (%p221) target = $region36
        $region35: #{tpu_custom_call.1} parent=31 // pred_region
          %224 = dma.done %s217, 1024
        $region36: #{tpu_custom_call.1} parent=31 // pred_fallthru
          _
        %s225 = sand.u32 %s49, 1
        %s226 = scalar_lea.sflag [#allocation4], %s225
        %s227 = sand.u32 %s49, 1
        %s228 = smul.addr %s227, 64
        %s229 = scalar_lea.vmem [#allocation3], %s228
        %p230 = pneg %p62
        %p231 = pneg %p59
        %s232 = sadd.s32 %s25, %s27
        %p233 = scmp.lt.s32.totalorder %s232, 1
        %s234 = scalar_select %p233, %s232, 1
        %s235 = smul.addr %s234, 3
        %s236 = smul.addr %s235, 8
        %s237 = scalar_lea.vmem %s1, %s236
        %p238 = pneg %p90
        %p239 = pneg %p87
        %s240 = sadd.s32 %s25, %s27
        %p241 = scmp.lt.s32.totalorder %s240, 1
        %s242 = scalar_select %p241, %s240, 1
        %s243 = smul.addr %s242, 2
        %s244 = smul.addr %s243, 8
        %s245 = scalar_lea.vmem %s2, %s244
        %p246 = pneg %p118
        %p247 = pneg %p115
        %p248 = pneg %p148
        %p249 = pneg %p145
        %s250 = sand.u32 %s135, 1
        %s251 = scalar_lea.sflag [#allocation5], %s250
        %s252 = sand.u32 %s135, 1
        %s253 = smul.addr %s252, 28
        %s254 = scalar_lea.vmem [#allocation6], %s253
        %s255 = sadd.s32 %s25, %s26
        %s256 = sadd.s32 %s25, %s27
        %p257 = scmp.lt.s32.totalorder %s256, 1
        %s258 = scalar_select %p257, %s256, 1
        %s259 = smul.addr %s258, 3
        %s260 = smul.addr %s259, 8
        %s261 = scalar_lea.vmem %s1, %s260
        %s262 = sadd.s32 %s25, %s27
        %s263 = sadd.s32 %s25, %s27
        %p264 = scmp.lt.s32.totalorder %s263, 1
        %s265 = scalar_select %p264, %s263, 1
        %s266 = smul.addr %s265, 2
        %s267 = smul.addr %s266, 8
        %s268 = scalar_lea.vmem %s2, %s267
        %s269 = sadd.s32 %s25, %s27
        %s270 = sadd.s32 %s25, %s26
        %s271 = sadd.s32 %s270, %s27
        %v272 = vld [vmem:[%s220] sm:$0xff]
        %v273 = vld [vmem:[%s220 + $0x8] sm:$0xff]
        %v274 = vld [vmem:[%s220 + $0x10] sm:$0xff]
        %v275 = vld [vmem:[%s220 + $0x18] sm:$0xff]
        %v276 = vld [vmem:[%s220 + $0x20] sm:$0xff]
        %v277 = vld [vmem:[%s220 + $0x28] sm:$0xff]
        %v278 = vld [vmem:[%s220 + $0x30] sm:$0xff]
        %v279 = vld [vmem:[%s220 + $0x38] sm:$0xff]
        %v280 = vld [vmem:[%s268] sm:$0xff]
        %v281 = vld [vmem:[%s268 + $0x8] sm:$0xff]
        %vm282 = vcmask 130048
        %v284 = vsel %vm282, %v272, 0
        %v287 = vsel %vm282, %v273, 0
        %v290 = vsel %vm282, %v274, 0
        %v293 = vsel %vm282, %v275, 0
        %v296 = vsel %vm282, %v276, 0
        %v299 = vsel %vm282, %v277, 0
        %v302 = vsel %vm282, %v278, 0
        %v305 = vsel %vm282, %v279, 0
        %307 = vmatprep.subr.mxu0 0.0
        %308 = vmatpush1.msra.mxu0 0.0
        %309 = vmatprep.subr.mxu0 0.0
        %310 = vmatpush1.msra.mxu0 0.0
        %311 = vmatprep.subr.mxu0 0.0
        %312 = vmatpush1.msra.mxu0 0.0
        %313 = vmatprep.subr.mxu0 0.0
        %314 = vmatpush1.msra.mxu0 0.0
        %315 = vmatprep.subr.mxu0 0.0
        %316 = vmatpush1.msra.mxu0 0.0
        %317 = vmatprep.subr.mxu0 0.0
        %318 = vmatpush1.msra.mxu0 0.0
        %319 = vmatprep.subr.mxu0 0.0
        %320 = vmatpush1.msra.mxu0 0.0
        %321 = vmatprep.subr.mxu0 0.0
        %322 = vmatpush1.msra.mxu0 0.0
        %323 = vmatprep.subr.mxu0 0.0
        %324 = vmatpush1.msra.mxu0 0.0
        %325 = vmatprep.subr.mxu0 0.0
        %326 = vmatpush1.msra.mxu0 0.0
        %327 = vmatprep.subr.mxu0 0.0
        %328 = vmatpush1.msra.mxu0 0.0
        %329 = vmatprep.subr.mxu0 0.0
        %330 = vmatpush1.msra.mxu0 0.0
        %331 = vmatprep.subr.mxu0 0.0
        %332 = vmatpush1.msra.mxu0 0.0
        %333 = vmatprep.subr.mxu0 0.0
        %334 = vmatpush1.msra.mxu0 0.0
        %335 = vmatprep.subr.mxu0 0.0
        %336 = vmatpush1.msra.mxu0 %v281
        %337 = vmatprep.subr.mxu0 0.0
        %338 = vmatpush1.msra.mxu0 %v280
        %339 = vmatprep.subr.mxu0 0.0
        %340 = vmatpush2.msra.mxu0 0.0
        %341 = vmatprep.subr.mxu0 0.0
        %342 = vmatpush2.msra.mxu0 0.0
        %343 = vmatprep.subr.mxu0 0.0
        %344 = vmatpush2.msra.mxu0 0.0
        %345 = vmatprep.subr.mxu0 0.0
        %346 = vmatpush2.msra.mxu0 0.0
        %347 = vmatprep.subr.mxu0 0.0
        %348 = vmatpush2.msra.mxu0 0.0
        %349 = vmatprep.subr.mxu0 0.0
        %350 = vmatpush2.msra.mxu0 0.0
        %351 = vmatprep.subr.mxu0 0.0
        %352 = vmatpush2.msra.mxu0 0.0
        %353 = vmatprep.subr.mxu0 0.0
        %354 = vmatpush2.msra.mxu0 0.0
        %355 = vmatprep.subr.mxu0 0.0
        %356 = vmatpush2.msra.mxu0 0.0
        %357 = vmatprep.subr.mxu0 0.0
        %358 = vmatpush2.msra.mxu0 0.0
        %359 = vmatprep.subr.mxu0 0.0
        %360 = vmatpush2.msra.mxu0 0.0
        %361 = vmatprep.subr.mxu0 0.0
        %362 = vmatpush2.msra.mxu0 0.0
        %363 = vmatprep.subr.mxu0 0.0
        %364 = vmatpush2.msra.mxu0 0.0
        %365 = vmatprep.subr.mxu0 0.0
        %366 = vmatpush2.msra.mxu0 0.0
        %367 = vmatprep.subr.mxu0 0.0
        %368 = vmatpush2.msra.mxu0 0.0
        %369 = vmatprep.subr.mxu0 0.0
        %370 = vmatpush2.msra.mxu0 0.0
        %371 = vmatprep.mubr.f32.mxu0 0.0
        %372 = vmatmul.mubr.f32.gmra.mxu0 %v284
        %v373 = vpop.f32.mrf.mxu0
        %v374 = vadd.f32 0.0, %v373
        %v375 = vpop.f32.mrf.mxu0
        %376 = vmatprep.mubr.f32.mxu0 0.0
        %377 = vmatmul.mubr.f32.gmra.mxu0 %v287
        %v378 = vpop.f32.mrf.mxu0
        %v379 = vadd.f32 0.0, %v378
        %v380 = vpop.f32.mrf.mxu0
        %381 = vmatprep.mubr.f32.mxu0 0.0
        %382 = vmatmul.mubr.f32.gmra.mxu0 %v290
        %v383 = vpop.f32.mrf.mxu0
        %v384 = vadd.f32 0.0, %v383
        %v385 = vpop.f32.mrf.mxu0
        %386 = vmatprep.mubr.f32.mxu0 0.0
        %387 = vmatmul.mubr.f32.gmra.mxu0 %v293
        %v388 = vpop.f32.mrf.mxu0
        %v389 = vadd.f32 0.0, %v388
        %v390 = vpop.f32.mrf.mxu0
        %391 = vmatprep.mubr.f32.mxu0 0.0
        %392 = vmatmul.mubr.f32.gmra.mxu0 %v296
        %v393 = vpop.f32.mrf.mxu0
        %v394 = vadd.f32 0.0, %v393
        %v395 = vpop.f32.mrf.mxu0
        %396 = vmatprep.mubr.f32.mxu0 0.0
        %397 = vmatmul.mubr.f32.gmra.mxu0 %v299
        %v398 = vpop.f32.mrf.mxu0
        %v399 = vadd.f32 0.0, %v398
        %v400 = vpop.f32.mrf.mxu0
        %401 = vmatprep.mubr.f32.mxu0 0.0
        %402 = vmatmul.mubr.f32.gmra.mxu0 %v302
        %v403 = vpop.f32.mrf.mxu0
        %v404 = vadd.f32 0.0, %v403
        %v405 = vpop.f32.mrf.mxu0
        %406 = vmatprep.mubr.f32.mxu0 0.0
        %407 = vmatmul.mubr.f32.gmra.mxu0 %v305
        %v408 = vpop.f32.mrf.mxu0
        %v409 = vadd.f32 0.0, %v408
        %v410 = vpop.f32.mrf.mxu0
        %411 = vdwg.mxu0
        %vm412 = vcmask 171008
        %413 = vst.msk [vmem:[#allocation2] sm:$0xff] %vm412, %v374
        %414 = vst.msk [vmem:[#allocation2 + $0x8] sm:$0xff] %vm412, %v379
        %415 = vst.msk [vmem:[#allocation2 + $0x10] sm:$0xff] %vm412, %v384
        %416 = vst.msk [vmem:[#allocation2 + $0x18] sm:$0xff] %vm412, %v389
        %417 = vst.msk [vmem:[#allocation2 + $0x20] sm:$0xff] %vm412, %v394
        %418 = vst.msk [vmem:[#allocation2 + $0x28] sm:$0xff] %vm412, %v399
        %419 = vst.msk [vmem:[#allocation2 + $0x30] sm:$0xff] %vm412, %v404
        %420 = vst.msk [vmem:[#allocation2 + $0x38] sm:$0xff] %vm412, %v409
        %v421 = vld [vmem:[%s261] sm:$0x7f]
        %v422 = vld [vmem:[#allocation2] sm:$0xff]
        %v423 = vld [vmem:[#allocation2 + $0x8] sm:$0xff]
        %v424 = vld [vmem:[#allocation2 + $0x10] sm:$0xff]
        %v425 = vld [vmem:[#allocation2 + $0x18] sm:$0xff]
        %v426 = vld [vmem:[#allocation2 + $0x20] sm:$0xff]
        %v427 = vld [vmem:[#allocation2 + $0x28] sm:$0xff]
        %v428 = vld [vmem:[#allocation2 + $0x30] sm:$0xff]
        %v429 = vld [vmem:[#allocation2 + $0x38] sm:$0xff]
        %v430 = vcombine.low %v422, %v426
        %v431 = vcombine.high %v422, %v426
        %v433 = vunpack.c.l.s4 1983009808
        %v434 = vunpack.c.0.s8 %v433
        %v435 = vlaneseq
        %v436 = vshrl.u32 %v435, 7
        %v437 = vsub.s32 %v434, %v436
        %v438 = vrot.slane %v430, %v437
        %v440 = vunpack.c.l.s4 1983009808
        %v441 = vunpack.c.0.s8 %v440
        %v442 = vlaneseq
        %v443 = vshrl.u32 %v442, 7
        %v444 = vsub.s32 %v441, %v443
        %v445 = vrot.slane %v431, %v444
        %v446 = vcombine.low %v424, %v428
        %v447 = vcombine.high %v424, %v428
        %v449 = vunpack.c.l.s4 1983009808
        %v450 = vunpack.c.0.s8 %v449
        %v451 = vlaneseq
        %v452 = vshrl.u32 %v451, 7
        %v453 = vsub.s32 %v450, %v452
        %v454 = vrot.slane %v446, %v453
        %v456 = vunpack.c.l.s4 1983009808
        %v457 = vunpack.c.0.s8 %v456
        %v458 = vlaneseq
        %v459 = vshrl.u32 %v458, 7
        %v460 = vsub.s32 %v457, %v459
        %v461 = vrot.slane %v447, %v460
        %v462 = vcombine.low %v438, %v454
        %v463 = vcombine.high %v438, %v454
        %v465 = vunpack.c.l.s4 1934713408
        %v466 = vunpack.c.0.s8 %v465
        %v467 = vlaneseq
        %v468 = vshrl.u32 %v467, 7
        %v469 = vsub.s32 %v466, %v468
        %v470 = vrot.slane %v462, %v469
        %v472 = vunpack.c.l.s4 1934713408
        %v473 = vunpack.c.0.s8 %v472
        %v474 = vlaneseq
        %v475 = vshrl.u32 %v474, 7
        %v476 = vsub.s32 %v473, %v475
        %v477 = vrot.slane %v463, %v476
        %v478 = vcombine.low %v445, %v461
        %v479 = vcombine.high %v445, %v461
        %v481 = vunpack.c.l.s4 1934713408
        %v482 = vunpack.c.0.s8 %v481
        %v483 = vlaneseq
        %v484 = vshrl.u32 %v483, 7
        %v485 = vsub.s32 %v482, %v484
        %v486 = vrot.slane %v478, %v485
        %v488 = vunpack.c.l.s4 1934713408
        %v489 = vunpack.c.0.s8 %v488
        %v490 = vlaneseq
        %v491 = vshrl.u32 %v490, 7
        %v492 = vsub.s32 %v489, %v491
        %v493 = vrot.slane %v479, %v492
        %v494 = vcombine.high %v470, 0.0
        %v495 = vcombine.high %v477, 0.0
        %v496 = vcombine.high %v486, 0.0
        %v497 = vcombine.high %v493, 0.0
        %v498 = vcombine.low %v423, %v427
        %v499 = vcombine.high %v423, %v427
        %v501 = vunpack.c.l.s4 1983009808
        %v502 = vunpack.c.0.s8 %v501
        %v503 = vlaneseq
        %v504 = vshrl.u32 %v503, 7
        %v505 = vsub.s32 %v502, %v504
        %v506 = vrot.slane %v498, %v505
        %v508 = vunpack.c.l.s4 1983009808
        %v509 = vunpack.c.0.s8 %v508
        %v510 = vlaneseq
        %v511 = vshrl.u32 %v510, 7
        %v512 = vsub.s32 %v509, %v511
        %v513 = vrot.slane %v499, %v512
        %v514 = vcombine.low %v425, %v429
        %v515 = vcombine.high %v425, %v429
        %v517 = vunpack.c.l.s4 1983009808
        %v518 = vunpack.c.0.s8 %v517
        %v519 = vlaneseq
        %v520 = vshrl.u32 %v519, 7
        %v521 = vsub.s32 %v518, %v520
        %v522 = vrot.slane %v514, %v521
        %v524 = vunpack.c.l.s4 1983009808
        %v525 = vunpack.c.0.s8 %v524
        %v526 = vlaneseq
        %v527 = vshrl.u32 %v526, 7
        %v528 = vsub.s32 %v525, %v527
        %v529 = vrot.slane %v515, %v528
        %v530 = vcombine.low %v506, %v522
        %v531 = vcombine.high %v506, %v522
        %v533 = vunpack.c.l.s4 1934713408
        %v534 = vunpack.c.0.s8 %v533
        %v535 = vlaneseq
        %v536 = vshrl.u32 %v535, 7
        %v537 = vsub.s32 %v534, %v536
        %v538 = vrot.slane %v530, %v537
        %v540 = vunpack.c.l.s4 1934713408
        %v541 = vunpack.c.0.s8 %v540
        %v542 = vlaneseq
        %v543 = vshrl.u32 %v542, 7
        %v544 = vsub.s32 %v541, %v543
        %v545 = vrot.slane %v531, %v544
        %v546 = vcombine.low %v513, %v529
        %v547 = vcombine.high %v513, %v529
        %v549 = vunpack.c.l.s4 1934713408
        %v550 = vunpack.c.0.s8 %v549
        %v551 = vlaneseq
        %v552 = vshrl.u32 %v551, 7
        %v553 = vsub.s32 %v550, %v552
        %v554 = vrot.slane %v546, %v553
        %v556 = vunpack.c.l.s4 1934713408
        %v557 = vunpack.c.0.s8 %v556
        %v558 = vlaneseq
        %v559 = vshrl.u32 %v558, 7
        %v560 = vsub.s32 %v557, %v559
        %v561 = vrot.slane %v547, %v560
        %v562 = vcombine.high %v538, 0.0
        %v563 = vcombine.high %v545, 0.0
        %v564 = vcombine.high %v554, 0.0
        %v565 = vcombine.high %v561, 0.0
        %v566 = vcombine.low %v470, %v477
        %v568 = vunpack.c.l.s4 1983009808
        %v569 = vunpack.c.0.s8 %v568
        %v570 = vlaneseq
        %v571 = vshrl.u32 %v570, 7
        %v572 = vsub.s32 %v569, %v571
        %v573 = vrot.slane %v566, %v572
        %v574 = vcombine.low %v494, %v495
        %v576 = vunpack.c.l.s4 1983009808
        %v577 = vunpack.c.0.s8 %v576
        %v578 = vlaneseq
        %v579 = vshrl.u32 %v578, 7
        %v580 = vsub.s32 %v577, %v579
        %v581 = vrot.slane %v574, %v580
        %v582 = vcombine.low %v486, %v493
        %v584 = vunpack.c.l.s4 1983009808
        %v585 = vunpack.c.0.s8 %v584
        %v586 = vlaneseq
        %v587 = vshrl.u32 %v586, 7
        %v588 = vsub.s32 %v585, %v587
        %v589 = vrot.slane %v582, %v588
        %v590 = vcombine.low %v496, %v497
        %v592 = vunpack.c.l.s4 1983009808
        %v593 = vunpack.c.0.s8 %v592
        %v594 = vlaneseq
        %v595 = vshrl.u32 %v594, 7
        %v596 = vsub.s32 %v593, %v595
        %v597 = vrot.slane %v590, %v596
        %v598 = vcombine.low %v573, %v581
        %v599 = vcombine.high %v573, %v581
        %v601 = vunpack.c.l.s4 1934713408
        %v602 = vunpack.c.0.s8 %v601
        %v603 = vlaneseq
        %v604 = vshrl.u32 %v603, 7
        %v605 = vsub.s32 %v602, %v604
        %v606 = vrot.slane %v598, %v605
        %v608 = vunpack.c.l.s4 1934713408
        %v609 = vunpack.c.0.s8 %v608
        %v610 = vlaneseq
        %v611 = vshrl.u32 %v610, 7
        %v612 = vsub.s32 %v609, %v611
        %v613 = vrot.slane %v599, %v612
        %v614 = vcombine.low %v589, %v597
        %v615 = vcombine.high %v589, %v597
        %v617 = vunpack.c.l.s4 1934713408
        %v618 = vunpack.c.0.s8 %v617
        %v619 = vlaneseq
        %v620 = vshrl.u32 %v619, 7
        %v621 = vsub.s32 %v618, %v620
        %v622 = vrot.slane %v614, %v621
        %v624 = vunpack.c.l.s4 1934713408
        %v625 = vunpack.c.0.s8 %v624
        %v626 = vlaneseq
        %v627 = vshrl.u32 %v626, 7
        %v628 = vsub.s32 %v625, %v627
        %v629 = vrot.slane %v615, %v628
        %v630 = vcombine.low %v606, %v622
        %v631 = vcombine.high %v606, %v622
        %v632 = vcombine.low %v613, %v629
        %v633 = vcombine.high %v613, %v629
        %v634 = vcombine.low %v538, %v545
        %v636 = vunpack.c.l.s4 1983009808
        %v637 = vunpack.c.0.s8 %v636
        %v638 = vlaneseq
        %v639 = vshrl.u32 %v638, 7
        %v640 = vsub.s32 %v637, %v639
        %v641 = vrot.slane %v634, %v640
        %v642 = vcombine.low %v562, %v563
        %v644 = vunpack.c.l.s4 1983009808
        %v645 = vunpack.c.0.s8 %v644
        %v646 = vlaneseq
        %v647 = vshrl.u32 %v646, 7
        %v648 = vsub.s32 %v645, %v647
        %v649 = vrot.slane %v642, %v648
        %v650 = vcombine.low %v554, %v561
        %v652 = vunpack.c.l.s4 1983009808
        %v653 = vunpack.c.0.s8 %v652
        %v654 = vlaneseq
        %v655 = vshrl.u32 %v654, 7
        %v656 = vsub.s32 %v653, %v655
        %v657 = vrot.slane %v650, %v656
        %v658 = vcombine.low %v564, %v565
        %v660 = vunpack.c.l.s4 1983009808
        %v661 = vunpack.c.0.s8 %v660
        %v662 = vlaneseq
        %v663 = vshrl.u32 %v662, 7
        %v664 = vsub.s32 %v661, %v663
        %v665 = vrot.slane %v658, %v664
        %v666 = vcombine.low %v641, %v649
        %v667 = vcombine.high %v641, %v649
        %v669 = vunpack.c.l.s4 1934713408
        %v670 = vunpack.c.0.s8 %v669
        %v671 = vlaneseq
        %v672 = vshrl.u32 %v671, 7
        %v673 = vsub.s32 %v670, %v672
        %v674 = vrot.slane %v666, %v673
        %v676 = vunpack.c.l.s4 1934713408
        %v677 = vunpack.c.0.s8 %v676
        %v678 = vlaneseq
        %v679 = vshrl.u32 %v678, 7
        %v680 = vsub.s32 %v677, %v679
        %v681 = vrot.slane %v667, %v680
        %v682 = vcombine.low %v657, %v665
        %v683 = vcombine.high %v657, %v665
        %v685 = vunpack.c.l.s4 1934713408
        %v686 = vunpack.c.0.s8 %v685
        %v687 = vlaneseq
        %v688 = vshrl.u32 %v687, 7
        %v689 = vsub.s32 %v686, %v688
        %v690 = vrot.slane %v682, %v689
        %v692 = vunpack.c.l.s4 1934713408
        %v693 = vunpack.c.0.s8 %v692
        %v694 = vlaneseq
        %v695 = vshrl.u32 %v694, 7
        %v696 = vsub.s32 %v693, %v695
        %v697 = vrot.slane %v683, %v696
        %v698 = vcombine.low %v674, %v690
        %v699 = vcombine.high %v674, %v690
        %v700 = vcombine.low %v681, %v697
        %v701 = vcombine.high %v681, %v697
        %704 = vrot.lane.b32.xlu0 %v631, 7
        %v705 = vpop.permute.xlu0 %704
        %706 = vrot.lane.b32.xlu0 %v699, 7
        %v707 = vpop.permute.xlu0 %706
        %712 = vrot.lane.b32.xlu0 %v632, 14
        %v713 = vpop.permute.xlu0 %712
        %714 = vrot.lane.b32.xlu0 %v700, 14
        %v715 = vpop.permute.xlu0 %714
        %720 = vrot.lane.b32.xlu0 %v633, 21
        %v721 = vpop.permute.xlu0 %720
        %722 = vrot.lane.b32.xlu0 %v701, 21
        %v723 = vpop.permute.xlu0 %722
        %vm726 = vcmask 56320
        %v727 = vsel %vm726, %v630, %v705
        %v728 = vsel %vm726, %v698, %v707
        %vm729 = vcmask 113664
        %v730 = vsel %vm729, %v727, %v713
        %v731 = vsel %vm729, %v728, %v715
        %v732 = vsel %vm412, %v730, %v721
        %v733 = vsel %vm412, %v731, %v723
        %v734 = vcombine.low 0.0, 0.0
        %v736 = vunpack.c.l.s4 1983009808
        %v737 = vunpack.c.0.s8 %v736
        %v738 = vlaneseq
        %v739 = vshrl.u32 %v738, 7
        %v740 = vsub.s32 %v737, %v739
        %v741 = vrot.slane %v734, %v740
        %v743 = vunpack.c.l.s4 1983009808
        %v744 = vunpack.c.0.s8 %v743
        %v745 = vlaneseq
        %v746 = vshrl.u32 %v745, 7
        %v747 = vsub.s32 %v744, %v746
        %v748 = vcombine.low %v741, %v741
        %v749 = vcombine.high %v741, %v741
        %v751 = vunpack.c.l.s4 1934713408
        %v752 = vunpack.c.0.s8 %v751
        %v753 = vlaneseq
        %v754 = vshrl.u32 %v753, 7
        %v755 = vsub.s32 %v752, %v754
        %v756 = vrot.slane %v748, %v755
        %v758 = vunpack.c.l.s4 1934713408
        %v759 = vunpack.c.0.s8 %v758
        %v760 = vlaneseq
        %v761 = vshrl.u32 %v760, 7
        %v762 = vsub.s32 %v759, %v761
        %v763 = vrot.slane %v749, %v762
        %v764 = vcombine.low %v741, 0.0
        %v765 = vcombine.high %v741, 0.0
        %v767 = vunpack.c.l.s4 1934713408
        %v768 = vunpack.c.0.s8 %v767
        %v769 = vlaneseq
        %v770 = vshrl.u32 %v769, 7
        %v771 = vsub.s32 %v768, %v770
        %v772 = vrot.slane %v764, %v771
        %v774 = vunpack.c.l.s4 1934713408
        %v775 = vunpack.c.0.s8 %v774
        %v776 = vlaneseq
        %v777 = vshrl.u32 %v776, 7
        %v778 = vsub.s32 %v775, %v777
        %v779 = vrot.slane %v765, %v778
        %v780 = vcombine.low %v756, %v772
        %v781 = vcombine.high %v756, %v772
        %v782 = vcombine.low %v763, %v779
        %v783 = vcombine.high %v763, %v779
        %785 = vrot.lane.b32.xlu0 %v781, 7
        %v786 = vpop.permute.xlu0 %785
        %789 = vrot.lane.b32.xlu0 %v782, 14
        %v790 = vpop.permute.xlu0 %789
        %793 = vrot.lane.b32.xlu0 %v783, 21
        %v794 = vpop.permute.xlu0 %793
        %v796 = vsel %vm726, %v780, %v786
        %v797 = vsel %vm729, %v796, %v790
        %v798 = vsel %vm412, %v797, %v794
        %v800 = vsel %vm282, %v421, 0
        %802 = vmatprep.subr.mxu0 0.0
        %803 = vmatpush1.msra.mxu0 0.0
        %804 = vmatprep.subr.mxu0 0.0
        %805 = vmatpush1.msra.mxu0 0.0
        %806 = vmatprep.subr.mxu0 0.0
        %807 = vmatpush1.msra.mxu0 0.0
        %808 = vmatprep.subr.mxu0 0.0
        %809 = vmatpush1.msra.mxu0 0.0
        %810 = vmatprep.subr.mxu0 0.0
        %811 = vmatpush1.msra.mxu0 0.0
        %812 = vmatprep.subr.mxu0 0.0
        %813 = vmatpush1.msra.mxu0 0.0
        %814 = vmatprep.subr.mxu0 0.0
        %815 = vmatpush1.msra.mxu0 0.0
        %816 = vmatprep.subr.mxu0 0.0
        %817 = vmatpush1.msra.mxu0 0.0
        %818 = vmatprep.subr.mxu0 0.0
        %819 = vmatpush1.msra.mxu0 0.0
        %820 = vmatprep.subr.mxu0 0.0
        %821 = vmatpush1.msra.mxu0 0.0
        %822 = vmatprep.subr.mxu0 0.0
        %823 = vmatpush1.msra.mxu0 0.0
        %824 = vmatprep.subr.mxu0 0.0
        %825 = vmatpush1.msra.mxu0 0.0
        %826 = vmatprep.subr.mxu0 0.0
        %827 = vmatpush1.msra.mxu0 0.0
        %828 = vmatprep.subr.mxu0 0.0
        %829 = vmatpush1.msra.mxu0 0.0
        %830 = vmatprep.subr.mxu0 0.0
        %831 = vmatpush1.msra.mxu0 %v733
        %832 = vmatprep.subr.mxu0 0.0
        %833 = vmatpush1.msra.mxu0 %v732
        %834 = vmatprep.subr.mxu0 0.0
        %835 = vmatpush2.msra.mxu0 0.0
        %836 = vmatprep.subr.mxu0 0.0
        %837 = vmatpush2.msra.mxu0 0.0
        %838 = vmatprep.subr.mxu0 0.0
        %839 = vmatpush2.msra.mxu0 0.0
        %840 = vmatprep.subr.mxu0 0.0
        %841 = vmatpush2.msra.mxu0 0.0
        %842 = vmatprep.subr.mxu0 0.0
        %843 = vmatpush2.msra.mxu0 0.0
        %844 = vmatprep.subr.mxu0 0.0
        %845 = vmatpush2.msra.mxu0 0.0
        %846 = vmatprep.subr.mxu0 0.0
        %847 = vmatpush2.msra.mxu0 0.0
        %848 = vmatprep.subr.mxu0 0.0
        %849 = vmatpush2.msra.mxu0 0.0
        %850 = vmatprep.subr.mxu0 0.0
        %851 = vmatpush2.msra.mxu0 0.0
        %852 = vmatprep.subr.mxu0 0.0
        %853 = vmatpush2.msra.mxu0 0.0
        %854 = vmatprep.subr.mxu0 0.0
        %855 = vmatpush2.msra.mxu0 0.0
        %856 = vmatprep.subr.mxu0 0.0
        %857 = vmatpush2.msra.mxu0 0.0
        %858 = vmatprep.subr.mxu0 0.0
        %859 = vmatpush2.msra.mxu0 0.0
        %860 = vmatprep.subr.mxu0 0.0
        %861 = vmatpush2.msra.mxu0 0.0
        %862 = vmatprep.subr.mxu0 0.0
        %863 = vmatpush2.msra.mxu0 0.0
        %864 = vmatprep.subr.mxu0 0.0
        %865 = vmatpush2.msra.mxu0 0.0
        %866 = vmatprep.mubr.f32.mxu0 0.0
        %867 = vmatmul.mubr.f32.gmra.mxu0 %v800
        %v868 = vpop.f32.mrf.mxu0
        %v869 = vadd.f32 %v798, %v868
        %v870 = vpop.f32.mrf.mxu0
        %871 = vdwg.mxu0
        %873 = vrot.lane.b32.xlu0 %v869, 121
        %v874 = vpop.permute.xlu0 %873
        %876 = vrot.lane.b32.xlu0 %v869, 114
        %v877 = vpop.permute.xlu0 %876
        %879 = vrot.lane.b32.xlu0 %v869, 107
        %v880 = vpop.permute.xlu0 %879
        %v882 = vcombine.low %v869, %v877
        %v883 = vcombine.high %v869, %v877
        %v885 = vunpack.c.l.s4 1983009808
        %v886 = vunpack.c.0.s8 %v885
        %v887 = vlaneseq
        %v888 = vshrl.u32 %v887, 7
        %v889 = vsub.s32 %v886, %v888
        %v890 = vrot.slane %v882, %v889
        %v892 = vunpack.c.l.s4 1983009808
        %v893 = vunpack.c.0.s8 %v892
        %v894 = vlaneseq
        %v895 = vshrl.u32 %v894, 7
        %v896 = vsub.s32 %v893, %v895
        %v897 = vrot.slane %v883, %v896
        %v898 = vcombine.low %v874, %v880
        %v899 = vcombine.high %v874, %v880
        %v901 = vunpack.c.l.s4 1983009808
        %v902 = vunpack.c.0.s8 %v901
        %v903 = vlaneseq
        %v904 = vshrl.u32 %v903, 7
        %v905 = vsub.s32 %v902, %v904
        %v906 = vrot.slane %v898, %v905
        %v908 = vunpack.c.l.s4 1983009808
        %v909 = vunpack.c.0.s8 %v908
        %v910 = vlaneseq
        %v911 = vshrl.u32 %v910, 7
        %v912 = vsub.s32 %v909, %v911
        %v913 = vrot.slane %v899, %v912
        %v914 = vcombine.low %v890, %v906
        %v915 = vcombine.high %v890, %v906
        %v917 = vunpack.c.l.s4 1934713408
        %v918 = vunpack.c.0.s8 %v917
        %v919 = vlaneseq
        %v920 = vshrl.u32 %v919, 7
        %v921 = vsub.s32 %v918, %v920
        %v922 = vrot.slane %v914, %v921
        %v924 = vunpack.c.l.s4 1934713408
        %v925 = vunpack.c.0.s8 %v924
        %v926 = vlaneseq
        %v927 = vshrl.u32 %v926, 7
        %v928 = vsub.s32 %v925, %v927
        %v929 = vrot.slane %v915, %v928
        %v930 = vcombine.low %v897, %v913
        %v931 = vcombine.high %v897, %v913
        %v933 = vunpack.c.l.s4 1934713408
        %v934 = vunpack.c.0.s8 %v933
        %v935 = vlaneseq
        %v936 = vshrl.u32 %v935, 7
        %v937 = vsub.s32 %v934, %v936
        %v938 = vrot.slane %v930, %v937
        %v939 = vcombine.high %v922, 0.0
        %v940 = vcombine.high %v929, 0.0
        %v941 = vcombine.high %v938, 0.0
        %v943 = vunpack.c.l.s4 1934713408
        %v944 = vunpack.c.0.s8 %v943
        %v945 = vlaneseq
        %v946 = vshrl.u32 %v945, 7
        %v947 = vsub.s32 %v944, %v946
        %v948 = vrot.slane %v931, %v947
        %vm949 = vcmask 52224
        %950 = vst.msk [vmem:[%s254] sm:$0xf] %vm949, %v922
        %951 = vst.msk [vmem:[%s254 + $0x4] sm:$0xf] %vm949, %v939
        %952 = vst.msk [vmem:[%s254 + $0x8] sm:$0xf] %vm949, %v929
        %953 = vst.msk [vmem:[%s254 + $0xc] sm:$0xf] %vm949, %v940
        %954 = vst.msk [vmem:[%s254 + $0x10] sm:$0xf] %vm949, %v938
        %955 = vst.msk [vmem:[%s254 + $0x14] sm:$0xf] %vm949, %v941
        %956 = vst.msk [vmem:[%s254 + $0x18] sm:$0xf] %vm949, %v948
        %s957 = scalar_lea.vmem %s261, 8
        %v958 = vld [vmem:[%s957] sm:$0x7f]
        %v959 = vld [vmem:[#allocation2] sm:$0xff]
        %v960 = vld [vmem:[#allocation2 + $0x8] sm:$0xff]
        %v961 = vld [vmem:[#allocation2 + $0x10] sm:$0xff]
        %v962 = vld [vmem:[#allocation2 + $0x18] sm:$0xff]
        %v963 = vld [vmem:[#allocation2 + $0x20] sm:$0xff]
        %v964 = vld [vmem:[#allocation2 + $0x28] sm:$0xff]
        %v965 = vld [vmem:[#allocation2 + $0x30] sm:$0xff]
        %v966 = vld [vmem:[#allocation2 + $0x38] sm:$0xff]
        %975 = vrot.lane.b32.xlu0 %v959, 121
        %v976 = vpop.permute.xlu0 %975
        %977 = vrot.lane.b32.xlu0 %v960, 121
        %v978 = vpop.permute.xlu0 %977
        %979 = vrot.lane.b32.xlu0 %v961, 121
        %v980 = vpop.permute.xlu0 %979
        %981 = vrot.lane.b32.xlu0 %v962, 121
        %v982 = vpop.permute.xlu0 %981
        %983 = vrot.lane.b32.xlu0 %v963, 121
        %v984 = vpop.permute.xlu0 %983
        %985 = vrot.lane.b32.xlu0 %v964, 121
        %v986 = vpop.permute.xlu0 %985
        %987 = vrot.lane.b32.xlu0 %v965, 121
        %v988 = vpop.permute.xlu0 %987
        %989 = vrot.lane.b32.xlu0 %v966, 121
        %v990 = vpop.permute.xlu0 %989
        %v999 = vcombine.low %v976, %v984
        %v1000 = vcombine.high %v976, %v984
        %v1002 = vunpack.c.l.s4 1983009808
        %v1003 = vunpack.c.0.s8 %v1002
        %v1004 = vlaneseq
        %v1005 = vshrl.u32 %v1004, 7
        %v1006 = vsub.s32 %v1003, %v1005
        %v1007 = vrot.slane %v999, %v1006
        %v1009 = vunpack.c.l.s4 1983009808
        %v1010 = vunpack.c.0.s8 %v1009
        %v1011 = vlaneseq
        %v1012 = vshrl.u32 %v1011, 7
        %v1013 = vsub.s32 %v1010, %v1012
        %v1014 = vrot.slane %v1000, %v1013
        %v1015 = vcombine.low %v980, %v988
        %v1016 = vcombine.high %v980, %v988
        %v1018 = vunpack.c.l.s4 1983009808
        %v1019 = vunpack.c.0.s8 %v1018
        %v1020 = vlaneseq
        %v1021 = vshrl.u32 %v1020, 7
        %v1022 = vsub.s32 %v1019, %v1021
        %v1023 = vrot.slane %v1015, %v1022
        %v1025 = vunpack.c.l.s4 1983009808
        %v1026 = vunpack.c.0.s8 %v1025
        %v1027 = vlaneseq
        %v1028 = vshrl.u32 %v1027, 7
        %v1029 = vsub.s32 %v1026, %v1028
        %v1030 = vrot.slane %v1016, %v1029
        %v1031 = vcombine.low %v1007, %v1023
        %v1032 = vcombine.high %v1007, %v1023
        %v1034 = vunpack.c.l.s4 1934713408
        %v1035 = vunpack.c.0.s8 %v1034
        %v1036 = vlaneseq
        %v1037 = vshrl.u32 %v1036, 7
        %v1038 = vsub.s32 %v1035, %v1037
        %v1039 = vrot.slane %v1031, %v1038
        %v1041 = vunpack.c.l.s4 1934713408
        %v1042 = vunpack.c.0.s8 %v1041
        %v1043 = vlaneseq
        %v1044 = vshrl.u32 %v1043, 7
        %v1045 = vsub.s32 %v1042, %v1044
        %v1046 = vrot.slane %v1032, %v1045
        %v1047 = vcombine.low %v1014, %v1030
        %v1048 = vcombine.high %v1014, %v1030
        %v1050 = vunpack.c.l.s4 1934713408
        %v1051 = vunpack.c.0.s8 %v1050
        %v1052 = vlaneseq
        %v1053 = vshrl.u32 %v1052, 7
        %v1054 = vsub.s32 %v1051, %v1053
        %v1055 = vrot.slane %v1047, %v1054
        %v1057 = vunpack.c.l.s4 1934713408
        %v1058 = vunpack.c.0.s8 %v1057
        %v1059 = vlaneseq
        %v1060 = vshrl.u32 %v1059, 7
        %v1061 = vsub.s32 %v1058, %v1060
        %v1062 = vrot.slane %v1048, %v1061
        %v1063 = vcombine.high %v1039, 0.0
        %v1064 = vcombine.high %v1046, 0.0
        %v1065 = vcombine.high %v1055, 0.0
        %v1066 = vcombine.high %v1062, 0.0
        %v1067 = vcombine.low %v978, %v986
        %v1068 = vcombine.high %v978, %v986
        %v1070 = vunpack.c.l.s4 1983009808
        %v1071 = vunpack.c.0.s8 %v1070
        %v1072 = vlaneseq
        %v1073 = vshrl.u32 %v1072, 7
        %v1074 = vsub.s32 %v1071, %v1073
        %v1075 = vrot.slane %v1067, %v1074
        %v1077 = vunpack.c.l.s4 1983009808
        %v1078 = vunpack.c.0.s8 %v1077
        %v1079 = vlaneseq
        %v1080 = vshrl.u32 %v1079, 7
        %v1081 = vsub.s32 %v1078, %v1080
        %v1082 = vrot.slane %v1068, %v1081
        %v1083 = vcombine.low %v982, %v990
        %v1084 = vcombine.high %v982, %v990
        %v1086 = vunpack.c.l.s4 1983009808
        %v1087 = vunpack.c.0.s8 %v1086
        %v1088 = vlaneseq
        %v1089 = vshrl.u32 %v1088, 7
        %v1090 = vsub.s32 %v1087, %v1089
        %v1091 = vrot.slane %v1083, %v1090
        %v1093 = vunpack.c.l.s4 1983009808
        %v1094 = vunpack.c.0.s8 %v1093
        %v1095 = vlaneseq
        %v1096 = vshrl.u32 %v1095, 7
        %v1097 = vsub.s32 %v1094, %v1096
        %v1098 = vrot.slane %v1084, %v1097
        %v1099 = vcombine.low %v1075, %v1091
        %v1100 = vcombine.high %v1075, %v1091
        %v1102 = vunpack.c.l.s4 1934713408
        %v1103 = vunpack.c.0.s8 %v1102
        %v1104 = vlaneseq
        %v1105 = vshrl.u32 %v1104, 7
        %v1106 = vsub.s32 %v1103, %v1105
        %v1107 = vrot.slane %v1099, %v1106
        %v1109 = vunpack.c.l.s4 1934713408
        %v1110 = vunpack.c.0.s8 %v1109
        %v1111 = vlaneseq
        %v1112 = vshrl.u32 %v1111, 7
        %v1113 = vsub.s32 %v1110, %v1112
        %v1114 = vrot.slane %v1100, %v1113
        %v1115 = vcombine.low %v1082, %v1098
        %v1116 = vcombine.high %v1082, %v1098
        %v1118 = vunpack.c.l.s4 1934713408
        %v1119 = vunpack.c.0.s8 %v1118
        %v1120 = vlaneseq
        %v1121 = vshrl.u32 %v1120, 7
        %v1122 = vsub.s32 %v1119, %v1121
        %v1123 = vrot.slane %v1115, %v1122
        %v1125 = vunpack.c.l.s4 1934713408
        %v1126 = vunpack.c.0.s8 %v1125
        %v1127 = vlaneseq
        %v1128 = vshrl.u32 %v1127, 7
        %v1129 = vsub.s32 %v1126, %v1128
        %v1130 = vrot.slane %v1116, %v1129
        %v1131 = vcombine.high %v1107, 0.0
        %v1132 = vcombine.high %v1114, 0.0
        %v1133 = vcombine.high %v1123, 0.0
        %v1134 = vcombine.high %v1130, 0.0
        %v1135 = vcombine.low %v1039, %v1046
        %v1137 = vunpack.c.l.s4 1983009808
        %v1138 = vunpack.c.0.s8 %v1137
        %v1139 = vlaneseq
        %v1140 = vshrl.u32 %v1139, 7
        %v1141 = vsub.s32 %v1138, %v1140
        %v1142 = vrot.slane %v1135, %v1141
        %v1143 = vcombine.low %v1063, %v1064
        %v1145 = vunpack.c.l.s4 1983009808
        %v1146 = vunpack.c.0.s8 %v1145
        %v1147 = vlaneseq
        %v1148 = vshrl.u32 %v1147, 7
        %v1149 = vsub.s32 %v1146, %v1148
        %v1150 = vrot.slane %v1143, %v1149
        %v1151 = vcombine.low %v1055, %v1062
        %v1153 = vunpack.c.l.s4 1983009808
        %v1154 = vunpack.c.0.s8 %v1153
        %v1155 = vlaneseq
        %v1156 = vshrl.u32 %v1155, 7
        %v1157 = vsub.s32 %v1154, %v1156
        %v1158 = vrot.slane %v1151, %v1157
        %v1159 = vcombine.low %v1065, %v1066
        %v1161 = vunpack.c.l.s4 1983009808
        %v1162 = vunpack.c.0.s8 %v1161
        %v1163 = vlaneseq
        %v1164 = vshrl.u32 %v1163, 7
        %v1165 = vsub.s32 %v1162, %v1164
        %v1166 = vrot.slane %v1159, %v1165
        %v1167 = vcombine.low %v1142, %v1150
        %v1168 = vcombine.high %v1142, %v1150
        %v1170 = vunpack.c.l.s4 1934713408
        %v1171 = vunpack.c.0.s8 %v1170
        %v1172 = vlaneseq
        %v1173 = vshrl.u32 %v1172, 7
        %v1174 = vsub.s32 %v1171, %v1173
        %v1175 = vrot.slane %v1167, %v1174
        %v1177 = vunpack.c.l.s4 1934713408
        %v1178 = vunpack.c.0.s8 %v1177
        %v1179 = vlaneseq
        %v1180 = vshrl.u32 %v1179, 7
        %v1181 = vsub.s32 %v1178, %v1180
        %v1182 = vrot.slane %v1168, %v1181
        %v1183 = vcombine.low %v1158, %v1166
        %v1184 = vcombine.high %v1158, %v1166
        %v1186 = vunpack.c.l.s4 1934713408
        %v1187 = vunpack.c.0.s8 %v1186
        %v1188 = vlaneseq
        %v1189 = vshrl.u32 %v1188, 7
        %v1190 = vsub.s32 %v1187, %v1189
        %v1191 = vrot.slane %v1183, %v1190
        %v1193 = vunpack.c.l.s4 1934713408
        %v1194 = vunpack.c.0.s8 %v1193
        %v1195 = vlaneseq
        %v1196 = vshrl.u32 %v1195, 7
        %v1197 = vsub.s32 %v1194, %v1196
        %v1198 = vrot.slane %v1184, %v1197
        %v1199 = vcombine.low %v1175, %v1191
        %v1200 = vcombine.high %v1175, %v1191
        %v1201 = vcombine.low %v1182, %v1198
        %v1202 = vcombine.high %v1182, %v1198
        %v1203 = vcombine.low %v1107, %v1114
        %v1205 = vunpack.c.l.s4 1983009808
        %v1206 = vunpack.c.0.s8 %v1205
        %v1207 = vlaneseq
        %v1208 = vshrl.u32 %v1207, 7
        %v1209 = vsub.s32 %v1206, %v1208
        %v1210 = vrot.slane %v1203, %v1209
        %v1211 = vcombine.low %v1131, %v1132
        %v1213 = vunpack.c.l.s4 1983009808
        %v1214 = vunpack.c.0.s8 %v1213
        %v1215 = vlaneseq
        %v1216 = vshrl.u32 %v1215, 7
        %v1217 = vsub.s32 %v1214, %v1216
        %v1218 = vrot.slane %v1211, %v1217
        %v1219 = vcombine.low %v1123, %v1130
        %v1221 = vunpack.c.l.s4 1983009808
        %v1222 = vunpack.c.0.s8 %v1221
        %v1223 = vlaneseq
        %v1224 = vshrl.u32 %v1223, 7
        %v1225 = vsub.s32 %v1222, %v1224
        %v1226 = vrot.slane %v1219, %v1225
        %v1227 = vcombine.low %v1133, %v1134
        %v1229 = vunpack.c.l.s4 1983009808
        %v1230 = vunpack.c.0.s8 %v1229
        %v1231 = vlaneseq
        %v1232 = vshrl.u32 %v1231, 7
        %v1233 = vsub.s32 %v1230, %v1232
        %v1234 = vrot.slane %v1227, %v1233
        %v1235 = vcombine.low %v1210, %v1218
        %v1236 = vcombine.high %v1210, %v1218
        %v1238 = vunpack.c.l.s4 1934713408
        %v1239 = vunpack.c.0.s8 %v1238
        %v1240 = vlaneseq
        %v1241 = vshrl.u32 %v1240, 7
        %v1242 = vsub.s32 %v1239, %v1241
        %v1243 = vrot.slane %v1235, %v1242
        %v1245 = vunpack.c.l.s4 1934713408
        %v1246 = vunpack.c.0.s8 %v1245
        %v1247 = vlaneseq
        %v1248 = vshrl.u32 %v1247, 7
        %v1249 = vsub.s32 %v1246, %v1248
        %v1250 = vrot.slane %v1236, %v1249
        %v1251 = vcombine.low %v1226, %v1234
        %v1252 = vcombine.high %v1226, %v1234
        %v1254 = vunpack.c.l.s4 1934713408
        %v1255 = vunpack.c.0.s8 %v1254
        %v1256 = vlaneseq
        %v1257 = vshrl.u32 %v1256, 7
        %v1258 = vsub.s32 %v1255, %v1257
        %v1259 = vrot.slane %v1251, %v1258
        %v1261 = vunpack.c.l.s4 1934713408
        %v1262 = vunpack.c.0.s8 %v1261
        %v1263 = vlaneseq
        %v1264 = vshrl.u32 %v1263, 7
        %v1265 = vsub.s32 %v1262, %v1264
        %v1266 = vrot.slane %v1252, %v1265
        %v1267 = vcombine.low %v1243, %v1259
        %v1268 = vcombine.high %v1243, %v1259
        %v1269 = vcombine.low %v1250, %v1266
        %v1270 = vcombine.high %v1250, %v1266
        %1273 = vrot.lane.b32.xlu0 %v1200, 7
        %v1274 = vpop.permute.xlu0 %1273
        %1275 = vrot.lane.b32.xlu0 %v1268, 7
        %v1276 = vpop.permute.xlu0 %1275
        %1281 = vrot.lane.b32.xlu0 %v1201, 14
        %v1282 = vpop.permute.xlu0 %1281
        %1283 = vrot.lane.b32.xlu0 %v1269, 14
        %v1284 = vpop.permute.xlu0 %1283
        %1289 = vrot.lane.b32.xlu0 %v1202, 21
        %v1290 = vpop.permute.xlu0 %1289
        %1291 = vrot.lane.b32.xlu0 %v1270, 21
        %v1292 = vpop.permute.xlu0 %1291
        %v1295 = vsel %vm726, %v1199, %v1274
        %v1296 = vsel %vm726, %v1267, %v1276
        %v1297 = vsel %vm729, %v1295, %v1282
        %v1298 = vsel %vm729, %v1296, %v1284
        %v1299 = vsel %vm412, %v1297, %v1290
        %v1300 = vsel %vm412, %v1298, %v1292
        %v1302 = vsel %vm282, %v958, 0
        %1304 = vmatprep.subr.mxu0 0.0
        %1305 = vmatpush1.msra.mxu0 0.0
        %1306 = vmatprep.subr.mxu0 0.0
        %1307 = vmatpush1.msra.mxu0 0.0
        %1308 = vmatprep.subr.mxu0 0.0
        %1309 = vmatpush1.msra.mxu0 0.0
        %1310 = vmatprep.subr.mxu0 0.0
        %1311 = vmatpush1.msra.mxu0 0.0
        %1312 = vmatprep.subr.mxu0 0.0
        %1313 = vmatpush1.msra.mxu0 0.0
        %1314 = vmatprep.subr.mxu0 0.0
        %1315 = vmatpush1.msra.mxu0 0.0
        %1316 = vmatprep.subr.mxu0 0.0
        %1317 = vmatpush1.msra.mxu0 0.0
        %1318 = vmatprep.subr.mxu0 0.0
        %1319 = vmatpush1.msra.mxu0 0.0
        %1320 = vmatprep.subr.mxu0 0.0
        %1321 = vmatpush1.msra.mxu0 0.0
        %1322 = vmatprep.subr.mxu0 0.0
        %1323 = vmatpush1.msra.mxu0 0.0
        %1324 = vmatprep.subr.mxu0 0.0
        %1325 = vmatpush1.msra.mxu0 0.0
        %1326 = vmatprep.subr.mxu0 0.0
        %1327 = vmatpush1.msra.mxu0 0.0
        %1328 = vmatprep.subr.mxu0 0.0
        %1329 = vmatpush1.msra.mxu0 0.0
        %1330 = vmatprep.subr.mxu0 0.0
        %1331 = vmatpush1.msra.mxu0 0.0
        %1332 = vmatprep.subr.mxu0 0.0
        %1333 = vmatpush1.msra.mxu0 %v1300
        %1334 = vmatprep.subr.mxu0 0.0
        %1335 = vmatpush1.msra.mxu0 %v1299
        %1336 = vmatprep.subr.mxu0 0.0
        %1337 = vmatpush2.msra.mxu0 0.0
        %1338 = vmatprep.subr.mxu0 0.0
        %1339 = vmatpush2.msra.mxu0 0.0
        %1340 = vmatprep.subr.mxu0 0.0
        %1341 = vmatpush2.msra.mxu0 0.0
        %1342 = vmatprep.subr.mxu0 0.0
        %1343 = vmatpush2.msra.mxu0 0.0
        %1344 = vmatprep.subr.mxu0 0.0
        %1345 = vmatpush2.msra.mxu0 0.0
        %1346 = vmatprep.subr.mxu0 0.0
        %1347 = vmatpush2.msra.mxu0 0.0
        %1348 = vmatprep.subr.mxu0 0.0
        %1349 = vmatpush2.msra.mxu0 0.0
        %1350 = vmatprep.subr.mxu0 0.0
        %1351 = vmatpush2.msra.mxu0 0.0
        %1352 = vmatprep.subr.mxu0 0.0
        %1353 = vmatpush2.msra.mxu0 0.0
        %1354 = vmatprep.subr.mxu0 0.0
        %1355 = vmatpush2.msra.mxu0 0.0
        %1356 = vmatprep.subr.mxu0 0.0
        %1357 = vmatpush2.msra.mxu0 0.0
        %1358 = vmatprep.subr.mxu0 0.0
        %1359 = vmatpush2.msra.mxu0 0.0
        %1360 = vmatprep.subr.mxu0 0.0
        %1361 = vmatpush2.msra.mxu0 0.0
        %1362 = vmatprep.subr.mxu0 0.0
        %1363 = vmatpush2.msra.mxu0 0.0
        %1364 = vmatprep.subr.mxu0 0.0
        %1365 = vmatpush2.msra.mxu0 0.0
        %1366 = vmatprep.subr.mxu0 0.0
        %1367 = vmatpush2.msra.mxu0 0.0
        %1368 = vmatprep.mubr.f32.mxu0 0.0
        %1369 = vmatmul.mubr.f32.gmra.mxu0 %v1302
        %v1370 = vpop.f32.mrf.mxu0
        %v1371 = vadd.f32 %v798, %v1370
        %v1372 = vpop.f32.mrf.mxu0
        %1373 = vdwg.mxu0
        %1375 = vrot.lane.b32.xlu0 %v1371, 121
        %v1376 = vpop.permute.xlu0 %1375
        %1378 = vrot.lane.b32.xlu0 %v1371, 114
        %v1379 = vpop.permute.xlu0 %1378
        %1381 = vrot.lane.b32.xlu0 %v1371, 107
        %v1382 = vpop.permute.xlu0 %1381
        %v1384 = vcombine.low %v1371, %v1379
        %v1385 = vcombine.high %v1371, %v1379
        %v1387 = vunpack.c.l.s4 1983009808
        %v1388 = vunpack.c.0.s8 %v1387
        %v1389 = vlaneseq
        %v1390 = vshrl.u32 %v1389, 7
        %v1391 = vsub.s32 %v1388, %v1390
        %v1392 = vrot.slane %v1384, %v1391
        %v1394 = vunpack.c.l.s4 1983009808
        %v1395 = vunpack.c.0.s8 %v1394
        %v1396 = vlaneseq
        %v1397 = vshrl.u32 %v1396, 7
        %v1398 = vsub.s32 %v1395, %v1397
        %v1399 = vrot.slane %v1385, %v1398
        %v1400 = vcombine.low %v1376, %v1382
        %v1401 = vcombine.high %v1376, %v1382
        %v1403 = vunpack.c.l.s4 1983009808
        %v1404 = vunpack.c.0.s8 %v1403
        %v1405 = vlaneseq
        %v1406 = vshrl.u32 %v1405, 7
        %v1407 = vsub.s32 %v1404, %v1406
        %v1408 = vrot.slane %v1400, %v1407
        %v1410 = vunpack.c.l.s4 1983009808
        %v1411 = vunpack.c.0.s8 %v1410
        %v1412 = vlaneseq
        %v1413 = vshrl.u32 %v1412, 7
        %v1414 = vsub.s32 %v1411, %v1413
        %v1415 = vrot.slane %v1401, %v1414
        %v1416 = vcombine.low %v1392, %v1408
        %v1417 = vcombine.high %v1392, %v1408
        %v1419 = vunpack.c.l.s4 1934713408
        %v1420 = vunpack.c.0.s8 %v1419
        %v1421 = vlaneseq
        %v1422 = vshrl.u32 %v1421, 7
        %v1423 = vsub.s32 %v1420, %v1422
        %v1424 = vrot.slane %v1416, %v1423
        %v1426 = vunpack.c.l.s4 1934713408
        %v1427 = vunpack.c.0.s8 %v1426
        %v1428 = vlaneseq
        %v1429 = vshrl.u32 %v1428, 7
        %v1430 = vsub.s32 %v1427, %v1429
        %v1431 = vrot.slane %v1417, %v1430
        %v1432 = vcombine.low %v1399, %v1415
        %v1433 = vcombine.high %v1399, %v1415
        %v1435 = vunpack.c.l.s4 1934713408
        %v1436 = vunpack.c.0.s8 %v1435
        %v1437 = vlaneseq
        %v1438 = vshrl.u32 %v1437, 7
        %v1439 = vsub.s32 %v1436, %v1438
        %v1440 = vrot.slane %v1432, %v1439
        %v1441 = vcombine.high %v1424, 0.0
        %v1442 = vcombine.high %v1431, 0.0
        %v1443 = vcombine.high %v1440, 0.0
        %v1445 = vunpack.c.l.s4 1934713408
        %v1446 = vunpack.c.0.s8 %v1445
        %v1447 = vlaneseq
        %v1448 = vshrl.u32 %v1447, 7
        %v1449 = vsub.s32 %v1446, %v1448
        %v1450 = vrot.slane %v1433, %v1449
        %1458 = vrot.lane.b32.xlu0 %v1424, 7
        %v1459 = vpop.permute.xlu0 %1458
        %1460 = vrot.lane.b32.xlu0 %v1441, 7
        %v1461 = vpop.permute.xlu0 %1460
        %1462 = vrot.lane.b32.xlu0 %v1431, 7
        %v1463 = vpop.permute.xlu0 %1462
        %1464 = vrot.lane.b32.xlu0 %v1442, 7
        %v1465 = vpop.permute.xlu0 %1464
        %1466 = vrot.lane.b32.xlu0 %v1440, 7
        %v1467 = vpop.permute.xlu0 %1466
        %1468 = vrot.lane.b32.xlu0 %v1443, 7
        %v1469 = vpop.permute.xlu0 %1468
        %1470 = vrot.lane.b32.xlu0 %v1450, 7
        %v1471 = vpop.permute.xlu0 %1470
        %vm1479 = vcmask 109624
        %1480 = vst.msk [vmem:[%s254] sm:$0xf] %vm1479, %v1459
        %1481 = vst.msk [vmem:[%s254 + $0x4] sm:$0xf] %vm1479, %v1461
        %1482 = vst.msk [vmem:[%s254 + $0x8] sm:$0xf] %vm1479, %v1463
        %1483 = vst.msk [vmem:[%s254 + $0xc] sm:$0xf] %vm1479, %v1465
        %1484 = vst.msk [vmem:[%s254 + $0x10] sm:$0xf] %vm1479, %v1467
        %1485 = vst.msk [vmem:[%s254 + $0x14] sm:$0xf] %vm1479, %v1469
        %1486 = vst.msk [vmem:[%s254 + $0x18] sm:$0xf] %vm1479, %v1471
        %s1487 = scalar_lea.vmem %s261, 16
        %v1488 = vld [vmem:[%s1487] sm:$0x7f]
        %v1489 = vld [vmem:[#allocation2] sm:$0xff]
        %v1490 = vld [vmem:[#allocation2 + $0x8] sm:$0xff]
        %v1491 = vld [vmem:[#allocation2 + $0x10] sm:$0xff]
        %v1492 = vld [vmem:[#allocation2 + $0x18] sm:$0xff]
        %v1493 = vld [vmem:[#allocation2 + $0x20] sm:$0xff]
        %v1494 = vld [vmem:[#allocation2 + $0x28] sm:$0xff]
        %v1495 = vld [vmem:[#allocation2 + $0x30] sm:$0xff]
        %v1496 = vld [vmem:[#allocation2 + $0x38] sm:$0xff]
        %1505 = vrot.lane.b32.xlu0 %v1489, 114
        %v1506 = vpop.permute.xlu0 %1505
        %1507 = vrot.lane.b32.xlu0 %v1490, 114
        %v1508 = vpop.permute.xlu0 %1507
        %1509 = vrot.lane.b32.xlu0 %v1491, 114
        %v1510 = vpop.permute.xlu0 %1509
        %1511 = vrot.lane.b32.xlu0 %v1492, 114
        %v1512 = vpop.permute.xlu0 %1511
        %1513 = vrot.lane.b32.xlu0 %v1493, 114
        %v1514 = vpop.permute.xlu0 %1513
        %1515 = vrot.lane.b32.xlu0 %v1494, 114
        %v1516 = vpop.permute.xlu0 %1515
        %1517 = vrot.lane.b32.xlu0 %v1495, 114
        %v1518 = vpop.permute.xlu0 %1517
        %1519 = vrot.lane.b32.xlu0 %v1496, 114
        %v1520 = vpop.permute.xlu0 %1519
        %v1529 = vcombine.low %v1506, %v1514
        %v1530 = vcombine.high %v1506, %v1514
        %v1532 = vunpack.c.l.s4 1983009808
        %v1533 = vunpack.c.0.s8 %v1532
        %v1534 = vlaneseq
        %v1535 = vshrl.u32 %v1534, 7
        %v1536 = vsub.s32 %v1533, %v1535
        %v1537 = vrot.slane %v1529, %v1536
        %v1539 = vunpack.c.l.s4 1983009808
        %v1540 = vunpack.c.0.s8 %v1539
        %v1541 = vlaneseq
        %v1542 = vshrl.u32 %v1541, 7
        %v1543 = vsub.s32 %v1540, %v1542
        %v1544 = vrot.slane %v1530, %v1543
        %v1545 = vcombine.low %v1510, %v1518
        %v1546 = vcombine.high %v1510, %v1518
        %v1548 = vunpack.c.l.s4 1983009808
        %v1549 = vunpack.c.0.s8 %v1548
        %v1550 = vlaneseq
        %v1551 = vshrl.u32 %v1550, 7
        %v1552 = vsub.s32 %v1549, %v1551
        %v1553 = vrot.slane %v1545, %v1552
        %v1555 = vunpack.c.l.s4 1983009808
        %v1556 = vunpack.c.0.s8 %v1555
        %v1557 = vlaneseq
        %v1558 = vshrl.u32 %v1557, 7
        %v1559 = vsub.s32 %v1556, %v1558
        %v1560 = vrot.slane %v1546, %v1559
        %v1561 = vcombine.low %v1537, %v1553
        %v1562 = vcombine.high %v1537, %v1553
        %v1564 = vunpack.c.l.s4 1934713408
        %v1565 = vunpack.c.0.s8 %v1564
        %v1566 = vlaneseq
        %v1567 = vshrl.u32 %v1566, 7
        %v1568 = vsub.s32 %v1565, %v1567
        %v1569 = vrot.slane %v1561, %v1568
        %v1571 = vunpack.c.l.s4 1934713408
        %v1572 = vunpack.c.0.s8 %v1571
        %v1573 = vlaneseq
        %v1574 = vshrl.u32 %v1573, 7
        %v1575 = vsub.s32 %v1572, %v1574
        %v1576 = vrot.slane %v1562, %v1575
        %v1577 = vcombine.low %v1544, %v1560
        %v1578 = vcombine.high %v1544, %v1560
        %v1580 = vunpack.c.l.s4 1934713408
        %v1581 = vunpack.c.0.s8 %v1580
        %v1582 = vlaneseq
        %v1583 = vshrl.u32 %v1582, 7
        %v1584 = vsub.s32 %v1581, %v1583
        %v1585 = vrot.slane %v1577, %v1584
        %v1587 = vunpack.c.l.s4 1934713408
        %v1588 = vunpack.c.0.s8 %v1587
        %v1589 = vlaneseq
        %v1590 = vshrl.u32 %v1589, 7
        %v1591 = vsub.s32 %v1588, %v1590
        %v1592 = vrot.slane %v1578, %v1591
        %v1593 = vcombine.high %v1569, 0.0
        %v1594 = vcombine.high %v1576, 0.0
        %v1595 = vcombine.high %v1585, 0.0
        %v1596 = vcombine.high %v1592, 0.0
        %v1597 = vcombine.low %v1508, %v1516
        %v1598 = vcombine.high %v1508, %v1516
        %v1600 = vunpack.c.l.s4 1983009808
        %v1601 = vunpack.c.0.s8 %v1600
        %v1602 = vlaneseq
        %v1603 = vshrl.u32 %v1602, 7
        %v1604 = vsub.s32 %v1601, %v1603
        %v1605 = vrot.slane %v1597, %v1604
        %v1607 = vunpack.c.l.s4 1983009808
        %v1608 = vunpack.c.0.s8 %v1607
        %v1609 = vlaneseq
        %v1610 = vshrl.u32 %v1609, 7
        %v1611 = vsub.s32 %v1608, %v1610
        %v1612 = vrot.slane %v1598, %v1611
        %v1613 = vcombine.low %v1512, %v1520
        %v1614 = vcombine.high %v1512, %v1520
        %v1616 = vunpack.c.l.s4 1983009808
        %v1617 = vunpack.c.0.s8 %v1616
        %v1618 = vlaneseq
        %v1619 = vshrl.u32 %v1618, 7
        %v1620 = vsub.s32 %v1617, %v1619
        %v1621 = vrot.slane %v1613, %v1620
        %v1623 = vunpack.c.l.s4 1983009808
        %v1624 = vunpack.c.0.s8 %v1623
        %v1625 = vlaneseq
        %v1626 = vshrl.u32 %v1625, 7
        %v1627 = vsub.s32 %v1624, %v1626
        %v1628 = vrot.slane %v1614, %v1627
        %v1629 = vcombine.low %v1605, %v1621
        %v1630 = vcombine.high %v1605, %v1621
        %v1632 = vunpack.c.l.s4 1934713408
        %v1633 = vunpack.c.0.s8 %v1632
        %v1634 = vlaneseq
        %v1635 = vshrl.u32 %v1634, 7
        %v1636 = vsub.s32 %v1633, %v1635
        %v1637 = vrot.slane %v1629, %v1636
        %v1639 = vunpack.c.l.s4 1934713408
        %v1640 = vunpack.c.0.s8 %v1639
        %v1641 = vlaneseq
        %v1642 = vshrl.u32 %v1641, 7
        %v1643 = vsub.s32 %v1640, %v1642
        %v1644 = vrot.slane %v1630, %v1643
        %v1645 = vcombine.low %v1612, %v1628
        %v1646 = vcombine.high %v1612, %v1628
        %v1648 = vunpack.c.l.s4 1934713408
        %v1649 = vunpack.c.0.s8 %v1648
        %v1650 = vlaneseq
        %v1651 = vshrl.u32 %v1650, 7
        %v1652 = vsub.s32 %v1649, %v1651
        %v1653 = vrot.slane %v1645, %v1652
        %v1655 = vunpack.c.l.s4 1934713408
        %v1656 = vunpack.c.0.s8 %v1655
        %v1657 = vlaneseq
        %v1658 = vshrl.u32 %v1657, 7
        %v1659 = vsub.s32 %v1656, %v1658
        %v1660 = vrot.slane %v1646, %v1659
        %v1661 = vcombine.high %v1637, 0.0
        %v1662 = vcombine.high %v1644, 0.0
        %v1663 = vcombine.high %v1653, 0.0
        %v1664 = vcombine.high %v1660, 0.0
        %v1665 = vcombine.low %v1569, %v1576
        %v1667 = vunpack.c.l.s4 1983009808
        %v1668 = vunpack.c.0.s8 %v1667
        %v1669 = vlaneseq
        %v1670 = vshrl.u32 %v1669, 7
        %v1671 = vsub.s32 %v1668, %v1670
        %v1672 = vrot.slane %v1665, %v1671
        %v1673 = vcombine.low %v1593, %v1594
        %v1675 = vunpack.c.l.s4 1983009808
        %v1676 = vunpack.c.0.s8 %v1675
        %v1677 = vlaneseq
        %v1678 = vshrl.u32 %v1677, 7
        %v1679 = vsub.s32 %v1676, %v1678
        %v1680 = vrot.slane %v1673, %v1679
        %v1681 = vcombine.low %v1585, %v1592
        %v1683 = vunpack.c.l.s4 1983009808
        %v1684 = vunpack.c.0.s8 %v1683
        %v1685 = vlaneseq
        %v1686 = vshrl.u32 %v1685, 7
        %v1687 = vsub.s32 %v1684, %v1686
        %v1688 = vrot.slane %v1681, %v1687
        %v1689 = vcombine.low %v1595, %v1596
        %v1691 = vunpack.c.l.s4 1983009808
        %v1692 = vunpack.c.0.s8 %v1691
        %v1693 = vlaneseq
        %v1694 = vshrl.u32 %v1693, 7
        %v1695 = vsub.s32 %v1692, %v1694
        %v1696 = vrot.slane %v1689, %v1695
        %v1697 = vcombine.low %v1672, %v1680
        %v1698 = vcombine.high %v1672, %v1680
        %v1700 = vunpack.c.l.s4 1934713408
        %v1701 = vunpack.c.0.s8 %v1700
        %v1702 = vlaneseq
        %v1703 = vshrl.u32 %v1702, 7
        %v1704 = vsub.s32 %v1701, %v1703
        %v1705 = vrot.slane %v1697, %v1704
        %v1707 = vunpack.c.l.s4 1934713408
        %v1708 = vunpack.c.0.s8 %v1707
        %v1709 = vlaneseq
        %v1710 = vshrl.u32 %v1709, 7
        %v1711 = vsub.s32 %v1708, %v1710
        %v1712 = vrot.slane %v1698, %v1711
        %v1713 = vcombine.low %v1688, %v1696
        %v1714 = vcombine.high %v1688, %v1696
        %v1716 = vunpack.c.l.s4 1934713408
        %v1717 = vunpack.c.0.s8 %v1716
        %v1718 = vlaneseq
        %v1719 = vshrl.u32 %v1718, 7
        %v1720 = vsub.s32 %v1717, %v1719
        %v1721 = vrot.slane %v1713, %v1720
        %v1723 = vunpack.c.l.s4 1934713408
        %v1724 = vunpack.c.0.s8 %v1723
        %v1725 = vlaneseq
        %v1726 = vshrl.u32 %v1725, 7
        %v1727 = vsub.s32 %v1724, %v1726
        %v1728 = vrot.slane %v1714, %v1727
        %v1729 = vcombine.low %v1705, %v1721
        %v1730 = vcombine.high %v1705, %v1721
        %v1731 = vcombine.low %v1712, %v1728
        %v1732 = vcombine.high %v1712, %v1728
        %v1733 = vcombine.low %v1637, %v1644
        %v1735 = vunpack.c.l.s4 1983009808
        %v1736 = vunpack.c.0.s8 %v1735
        %v1737 = vlaneseq
        %v1738 = vshrl.u32 %v1737, 7
        %v1739 = vsub.s32 %v1736, %v1738
        %v1740 = vrot.slane %v1733, %v1739
        %v1741 = vcombine.low %v1661, %v1662
        %v1743 = vunpack.c.l.s4 1983009808
        %v1744 = vunpack.c.0.s8 %v1743
        %v1745 = vlaneseq
        %v1746 = vshrl.u32 %v1745, 7
        %v1747 = vsub.s32 %v1744, %v1746
        %v1748 = vrot.slane %v1741, %v1747
        %v1749 = vcombine.low %v1653, %v1660
        %v1751 = vunpack.c.l.s4 1983009808
        %v1752 = vunpack.c.0.s8 %v1751
        %v1753 = vlaneseq
        %v1754 = vshrl.u32 %v1753, 7
        %v1755 = vsub.s32 %v1752, %v1754
        %v1756 = vrot.slane %v1749, %v1755
        %v1757 = vcombine.low %v1663, %v1664
        %v1759 = vunpack.c.l.s4 1983009808
        %v1760 = vunpack.c.0.s8 %v1759
        %v1761 = vlaneseq
        %v1762 = vshrl.u32 %v1761, 7
        %v1763 = vsub.s32 %v1760, %v1762
        %v1764 = vrot.slane %v1757, %v1763
        %v1765 = vcombine.low %v1740, %v1748
        %v1766 = vcombine.high %v1740, %v1748
        %v1768 = vunpack.c.l.s4 1934713408
        %v1769 = vunpack.c.0.s8 %v1768
        %v1770 = vlaneseq
        %v1771 = vshrl.u32 %v1770, 7
        %v1772 = vsub.s32 %v1769, %v1771
        %v1773 = vrot.slane %v1765, %v1772
        %v1775 = vunpack.c.l.s4 1934713408
        %v1776 = vunpack.c.0.s8 %v1775
        %v1777 = vlaneseq
        %v1778 = vshrl.u32 %v1777, 7
        %v1779 = vsub.s32 %v1776, %v1778
        %v1780 = vrot.slane %v1766, %v1779
        %v1781 = vcombine.low %v1756, %v1764
        %v1782 = vcombine.high %v1756, %v1764
        %v1784 = vunpack.c.l.s4 1934713408
        %v1785 = vunpack.c.0.s8 %v1784
        %v1786 = vlaneseq
        %v1787 = vshrl.u32 %v1786, 7
        %v1788 = vsub.s32 %v1785, %v1787
        %v1789 = vrot.slane %v1781, %v1788
        %v1791 = vunpack.c.l.s4 1934713408
        %v1792 = vunpack.c.0.s8 %v1791
        %v1793 = vlaneseq
        %v1794 = vshrl.u32 %v1793, 7
        %v1795 = vsub.s32 %v1792, %v1794
        %v1796 = vrot.slane %v1782, %v1795
        %v1797 = vcombine.low %v1773, %v1789
        %v1798 = vcombine.high %v1773, %v1789
        %v1799 = vcombine.low %v1780, %v1796
        %v1800 = vcombine.high %v1780, %v1796
        %1803 = vrot.lane.b32.xlu0 %v1730, 7
        %v1804 = vpop.permute.xlu0 %1803
        %1805 = vrot.lane.b32.xlu0 %v1798, 7
        %v1806 = vpop.permute.xlu0 %1805
        %1811 = vrot.lane.b32.xlu0 %v1731, 14
        %v1812 = vpop.permute.xlu0 %1811
        %1813 = vrot.lane.b32.xlu0 %v1799, 14
        %v1814 = vpop.permute.xlu0 %1813
        %1819 = vrot.lane.b32.xlu0 %v1732, 21
        %v1820 = vpop.permute.xlu0 %1819
        %1821 = vrot.lane.b32.xlu0 %v1800, 21
        %v1822 = vpop.permute.xlu0 %1821
        %v1825 = vsel %vm726, %v1729, %v1804
        %v1826 = vsel %vm726, %v1797, %v1806
        %v1827 = vsel %vm729, %v1825, %v1812
        %v1828 = vsel %vm729, %v1826, %v1814
        %v1829 = vsel %vm412, %v1827, %v1820
        %v1830 = vsel %vm412, %v1828, %v1822
        %v1832 = vsel %vm282, %v1488, 0
        %1834 = vmatprep.subr.mxu0 0.0
        %1835 = vmatpush1.msra.mxu0 0.0
        %1836 = vmatprep.subr.mxu0 0.0
        %1837 = vmatpush1.msra.mxu0 0.0
        %1838 = vmatprep.subr.mxu0 0.0
        %1839 = vmatpush1.msra.mxu0 0.0
        %1840 = vmatprep.subr.mxu0 0.0
        %1841 = vmatpush1.msra.mxu0 0.0
        %1842 = vmatprep.subr.mxu0 0.0
        %1843 = vmatpush1.msra.mxu0 0.0
        %1844 = vmatprep.subr.mxu0 0.0
        %1845 = vmatpush1.msra.mxu0 0.0
        %1846 = vmatprep.subr.mxu0 0.0
        %1847 = vmatpush1.msra.mxu0 0.0
        %1848 = vmatprep.subr.mxu0 0.0
        %1849 = vmatpush1.msra.mxu0 0.0
        %1850 = vmatprep.subr.mxu0 0.0
        %1851 = vmatpush1.msra.mxu0 0.0
        %1852 = vmatprep.subr.mxu0 0.0
        %1853 = vmatpush1.msra.mxu0 0.0
        %1854 = vmatprep.subr.mxu0 0.0
        %1855 = vmatpush1.msra.mxu0 0.0
        %1856 = vmatprep.subr.mxu0 0.0
        %1857 = vmatpush1.msra.mxu0 0.0
        %1858 = vmatprep.subr.mxu0 0.0
        %1859 = vmatpush1.msra.mxu0 0.0
        %1860 = vmatprep.subr.mxu0 0.0
        %1861 = vmatpush1.msra.mxu0 0.0
        %1862 = vmatprep.subr.mxu0 0.0
        %1863 = vmatpush1.msra.mxu0 %v1830
        %1864 = vmatprep.subr.mxu0 0.0
        %1865 = vmatpush1.msra.mxu0 %v1829
        %1866 = vmatprep.subr.mxu0 0.0
        %1867 = vmatpush2.msra.mxu0 0.0
        %1868 = vmatprep.subr.mxu0 0.0
        %1869 = vmatpush2.msra.mxu0 0.0
        %1870 = vmatprep.subr.mxu0 0.0
        %1871 = vmatpush2.msra.mxu0 0.0
        %1872 = vmatprep.subr.mxu0 0.0
        %1873 = vmatpush2.msra.mxu0 0.0
        %1874 = vmatprep.subr.mxu0 0.0
        %1875 = vmatpush2.msra.mxu0 0.0
        %1876 = vmatprep.subr.mxu0 0.0
        %1877 = vmatpush2.msra.mxu0 0.0
        %1878 = vmatprep.subr.mxu0 0.0
        %1879 = vmatpush2.msra.mxu0 0.0
        %1880 = vmatprep.subr.mxu0 0.0
        %1881 = vmatpush2.msra.mxu0 0.0
        %1882 = vmatprep.subr.mxu0 0.0
        %1883 = vmatpush2.msra.mxu0 0.0
        %1884 = vmatprep.subr.mxu0 0.0
        %1885 = vmatpush2.msra.mxu0 0.0
        %1886 = vmatprep.subr.mxu0 0.0
        %1887 = vmatpush2.msra.mxu0 0.0
        %1888 = vmatprep.subr.mxu0 0.0
        %1889 = vmatpush2.msra.mxu0 0.0
        %1890 = vmatprep.subr.mxu0 0.0
        %1891 = vmatpush2.msra.mxu0 0.0
        %1892 = vmatprep.subr.mxu0 0.0
        %1893 = vmatpush2.msra.mxu0 0.0
        %1894 = vmatprep.subr.mxu0 0.0
        %1895 = vmatpush2.msra.mxu0 0.0
        %1896 = vmatprep.subr.mxu0 0.0
        %1897 = vmatpush2.msra.mxu0 0.0
        %1898 = vmatprep.mubr.f32.mxu0 0.0
        %1899 = vmatmul.mubr.f32.gmra.mxu0 %v1832
        %v1900 = vpop.f32.mrf.mxu0
        %v1901 = vadd.f32 %v798, %v1900
        %v1902 = vpop.f32.mrf.mxu0
        %1903 = vdwg.mxu0
        %1905 = vrot.lane.b32.xlu0 %v1901, 121
        %v1906 = vpop.permute.xlu0 %1905
        %1908 = vrot.lane.b32.xlu0 %v1901, 114
        %v1909 = vpop.permute.xlu0 %1908
        %1911 = vrot.lane.b32.xlu0 %v1901, 107
        %v1912 = vpop.permute.xlu0 %1911
        %v1914 = vcombine.low %v1901, %v1909
        %v1915 = vcombine.high %v1901, %v1909
        %v1917 = vunpack.c.l.s4 1983009808
        %v1918 = vunpack.c.0.s8 %v1917
        %v1919 = vlaneseq
        %v1920 = vshrl.u32 %v1919, 7
        %v1921 = vsub.s32 %v1918, %v1920
        %v1922 = vrot.slane %v1914, %v1921
        %v1924 = vunpack.c.l.s4 1983009808
        %v1925 = vunpack.c.0.s8 %v1924
        %v1926 = vlaneseq
        %v1927 = vshrl.u32 %v1926, 7
        %v1928 = vsub.s32 %v1925, %v1927
        %v1929 = vrot.slane %v1915, %v1928
        %v1930 = vcombine.low %v1906, %v1912
        %v1931 = vcombine.high %v1906, %v1912
        %v1933 = vunpack.c.l.s4 1983009808
        %v1934 = vunpack.c.0.s8 %v1933
        %v1935 = vlaneseq
        %v1936 = vshrl.u32 %v1935, 7
        %v1937 = vsub.s32 %v1934, %v1936
        %v1938 = vrot.slane %v1930, %v1937
        %v1940 = vunpack.c.l.s4 1983009808
        %v1941 = vunpack.c.0.s8 %v1940
        %v1942 = vlaneseq
        %v1943 = vshrl.u32 %v1942, 7
        %v1944 = vsub.s32 %v1941, %v1943
        %v1945 = vrot.slane %v1931, %v1944
        %v1946 = vcombine.low %v1922, %v1938
        %v1947 = vcombine.high %v1922, %v1938
        %v1949 = vunpack.c.l.s4 1934713408
        %v1950 = vunpack.c.0.s8 %v1949
        %v1951 = vlaneseq
        %v1952 = vshrl.u32 %v1951, 7
        %v1953 = vsub.s32 %v1950, %v1952
        %v1954 = vrot.slane %v1946, %v1953
        %v1956 = vunpack.c.l.s4 1934713408
        %v1957 = vunpack.c.0.s8 %v1956
        %v1958 = vlaneseq
        %v1959 = vshrl.u32 %v1958, 7
        %v1960 = vsub.s32 %v1957, %v1959
        %v1961 = vrot.slane %v1947, %v1960
        %v1962 = vcombine.low %v1929, %v1945
        %v1963 = vcombine.high %v1929, %v1945
        %v1965 = vunpack.c.l.s4 1934713408
        %v1966 = vunpack.c.0.s8 %v1965
        %v1967 = vlaneseq
        %v1968 = vshrl.u32 %v1967, 7
        %v1969 = vsub.s32 %v1966, %v1968
        %v1970 = vrot.slane %v1962, %v1969
        %v1971 = vcombine.high %v1954, 0.0
        %v1972 = vcombine.high %v1961, 0.0
        %v1973 = vcombine.high %v1970, 0.0
        %v1975 = vunpack.c.l.s4 1934713408
        %v1976 = vunpack.c.0.s8 %v1975
        %v1977 = vlaneseq
        %v1978 = vshrl.u32 %v1977, 7
        %v1979 = vsub.s32 %v1976, %v1978
        %v1980 = vrot.slane %v1963, %v1979
        %1988 = vrot.lane.b32.xlu0 %v1954, 14
        %v1989 = vpop.permute.xlu0 %1988
        %1990 = vrot.lane.b32.xlu0 %v1971, 14
        %v1991 = vpop.permute.xlu0 %1990
        %1992 = vrot.lane.b32.xlu0 %v1961, 14
        %v1993 = vpop.permute.xlu0 %1992
        %1994 = vrot.lane.b32.xlu0 %v1972, 14
        %v1995 = vpop.permute.xlu0 %1994
        %1996 = vrot.lane.b32.xlu0 %v1970, 14
        %v1997 = vpop.permute.xlu0 %1996
        %1998 = vrot.lane.b32.xlu0 %v1973, 14
        %v1999 = vpop.permute.xlu0 %1998
        %2000 = vrot.lane.b32.xlu0 %v1980, 14
        %v2001 = vpop.permute.xlu0 %2000
        %vm2009 = vcmask 167024
        %2010 = vst.msk [vmem:[%s254] sm:$0xf] %vm2009, %v1989
        %2011 = vst.msk [vmem:[%s254 + $0x4] sm:$0xf] %vm2009, %v1991
        %2012 = vst.msk [vmem:[%s254 + $0x8] sm:$0xf] %vm2009, %v1993
        %2013 = vst.msk [vmem:[%s254 + $0xc] sm:$0xf] %vm2009, %v1995
        %2014 = vst.msk [vmem:[%s254 + $0x10] sm:$0xf] %vm2009, %v1997
        %2015 = vst.msk [vmem:[%s254 + $0x14] sm:$0xf] %vm2009, %v1999
        %2016 = vst.msk [vmem:[%s254 + $0x18] sm:$0xf] %vm2009, %v2001
        %s2017 = sand.u32 %s135, 1
        %s2018 = scalar_lea.sflag [#allocation5], %s2017
        %s2019 = sand.u32 %s135, 1
        %s2020 = smul.addr %s2019, 28
        %s2021 = scalar_lea.vmem [#allocation6], %s2020
        // Predicated region
        $region37: #{tpu_custom_call.1} parent=31 // pred_check
          %p2022 = pneg %p145
        $region38: #{tpu_custom_call.1} parent=31 // pred_check_branch
          %2024 = sbr.rel (%p2022) target = $region40
        $region39: #{tpu_custom_call.1} parent=31 // pred_region
          %s2025 = sadd.s32 %s25, %s26
          %s2026 = sadd.s32 %s2025, %s27
          %s2028 = ssub.s32 448, 448
          %2029 = vsyncadd %s2018, %s2028
          %s2030 = smul.addr %s2026, 7
          %s2031 = smul.addr %s2030, 64
          %s2032 = scalar_lea.hbm %s3, %s2031
          %s2033 = sshll.u32 %s2021, 4
          %s2034 = int_to_ptr.vmem [resolvable:$true] %s2033
          %2039 = dma.vmem_to_hbm [thread:$0]  %s2034, 448, %s2032, %s2018, 64, 64, 4
        $region40: #{tpu_custom_call.1} parent=31 // pred_fallthru
          _
      $region32: #{tpu_custom_call.1} parent=5 // pred_fallthru
        _
      %p2040 = scmp.le.s32.totalorder 2, %s15
      // Predicated region
      $region41: #{tpu_custom_call.1} parent=5 // pred_check
        %p2041 = pneg %p2040
      $region42: #{tpu_custom_call.1} parent=5 // pred_check_branch
        %2043 = sbr.rel (%p2041) target = $region44
      $region43: #{tpu_custom_call.1} parent=5 // pred_region
        %s2044 = ssub.s32 %s15, 2
        // Predicated region
        $region45: #{tpu_custom_call.1} parent=43 // pred_check
          %p2045 = pneg %p151
        $region46: #{tpu_custom_call.1} parent=43 // pred_check_branch
          %2047 = sbr.rel (%p2045) target = $region48
        $region47: #{tpu_custom_call.1} parent=43 // pred_region
          %s2048 = sand.u32 %s136, 1
          %s2049 = scalar_lea.sflag [#allocation5], %s2048
          %s2050 = sand.u32 %s136, 1
          %s2051 = smul.addr %s2050, 28
          %s2052 = scalar_lea.vmem [#allocation6], %s2051
          %2053 = dma.done %s2049, 448
        $region48: #{tpu_custom_call.1} parent=43 // pred_fallthru
          _
      $region44: #{tpu_custom_call.1} parent=5 // pred_fallthru
        _
    $region6: #{tpu_custom_call.1} parent=1 // loop_footer
      %s19 = sadd.s32 1, %s15
    $region7: #{tpu_custom_call.1} parent=1 // loop_footer_branch
      %14 = sbr.rel target = $region3
    $region8: #{tpu_custom_call.1} parent=1 // loop_exit
      _
    %2054 = vsyncpa [#allocation4], 1
    %s2055 = scalar_lea.sflag [#allocation4], 1
    %2056 = vsyncpa %s2055, 1
    %2057 = vsyncpa [#allocation5], 1
    %s2058 = scalar_lea.sflag [#allocation5], 1
    %2059 = vsyncpa %s2058, 1

</llo_original>
